<compile_context>
chip_gen: v7x
topology: tpu7x:2x2x1
jax: 0.10.0
libtpu: 0.0.40
codegen_flags: <defaults>
</compile_context>

<pallas_src>
import math

import jax
import jax.numpy as jnp
from jax.experimental import pallas as pl
from jax.experimental.pallas import tpu as pltpu


def gfft_kernel(x_ref, bt_ref, out_ref):
    # x_ref:   (1, C, TS)    native-layout spatial tile (spatial in lanes)
    # bt_ref:  (M, C)        (2*pi * B_scaled)^T, resident across the grid
    # out_ref: (1, 2*M, TS)  sin rows [0:M], cos rows [M:2M]
    m = bt_ref.shape[0]
    proj = jnp.dot(bt_ref[...], x_ref[0].astype(bt_ref.dtype),
                   preferred_element_type=jnp.float32)        # (M, TS) on MXU
    # NOTE: for m % 8 != 0 the cos-half store starts mid-sublane-tile; still
    # correct, just slightly slower.  Common m (32/64/128/256) is aligned.
    out_ref[0, :m, :] = jnp.sin(proj).astype(out_ref.dtype)
    out_ref[0, m:, :] = jnp.cos(proj).astype(out_ref.dtype)


def _round_up(x, mult):
    return (x + mult - 1) // mult * mult


def gaussian_fourier_feature_transform(x, B_scaled, out_dtype=jnp.float32):
    """x: (N, C, W, H), B_scaled: (C, M)  ->  (N, 2*M, W, H) in out_dtype."""
    n, c, w, h = x.shape
    c_b, m = B_scaled.shape
    assert c == c_b, f"Expected input to have {c_b} channels (got {c})"
    s = w * h

    # Free reshape to native (N, C, S); keep input dtype (no host astype pass).
    x_r = x.reshape(n, c, s)
    # Fold 2*pi into the (tiny) projection matrix once, transposed to (M, C).
    bt = ((2.0 * math.pi) * B_scaled.astype(jnp.float32)).T

    x_bytes = x_r.dtype.itemsize
    o_bytes = jnp.dtype(out_dtype).itemsize

    # ---- spatial tile selection (generation-aware VMEM budget) -------------
    try:
        vmem_cap = int(pltpu.get_tpu_info().vmem_capacity_bytes)
    except Exception:
        vmem_cap = 64 * 1024 * 1024          # conservative (v7x per-TC size)
    # ~40% of VMEM, clamped: ~25 MiB on v7x (64 MiB), 48 MiB on v5e/v6e (128).
    budget = min(max(vmem_cap * 2 // 5, 16 * 1024 * 1024), 48 * 1024 * 1024)

    # Per spatial element: double-buffered input + output tiles, plus the
    # (M, TS) f32 proj intermediate and sin/cos temporaries (~3*M f32).
    bytes_per_elem = 2 * c * x_bytes + 2 * (2 * m) * o_bytes + 3 * m * 4
    ts_cap = max(128, (budget // bytes_per_elem) // 128 * 128)
    ts_cap = min(ts_cap, 32768)              # amortize ~0.35us per grid step

    if s <= ts_cap:
        if n == 1 and s > 128:
            # Guarantee >= 2 parallel tiles so both v7x TensorCores get work.
            ts = _round_up(pl.cdiv(s, 2), 128)
        else:
            ts = s                           # full extent: legal block shape
    else:
        ts = ts_cap                          # multiple of 128 -> lane-dense
    grid = (n, pl.cdiv(s, ts))
    # Ragged last spatial block is clipped/masked by Pallas: no pad, no slice.

    in_tile = c * ts * x_bytes
    out_tile = 2 * m * ts * o_bytes
    footprint = 2 * in_tile + 2 * out_tile + 4 * m * ts      # + proj scratch
    vmem_limit = int(min(max(32 * 1024 * 1024,
                             footprint * 3 // 2 + (4 << 20)),
                         100 * 1024 * 1024))

    cost = pl.CostEstimate(
        flops=2 * n * s * m * c,
        transcendentals=2 * n * s * m,
        bytes_accessed=n * s * c * x_bytes + n * s * 2 * m * o_bytes + m * c * 4,
    )

    out = pl.pallas_call(
        gfft_kernel,
        out_shape=jax.ShapeDtypeStruct((n, 2 * m, s), out_dtype),
        grid_spec=pltpu.PrefetchScalarGridSpec(
            num_scalar_prefetch=0,
            grid=grid,
            in_specs=[
                pl.BlockSpec((1, c, ts), lambda i, j: (i, 0, j)),
                pl.BlockSpec((m, c), lambda i, j: (0, 0)),
            ],
            out_specs=pl.BlockSpec((1, 2 * m, ts), lambda i, j: (i, 0, j)),
        ),
        compiler_params=pltpu.CompilerParams(
            dimension_semantics=("parallel", "parallel"),
            vmem_limit_bytes=vmem_limit,
        ),
        cost_estimate=cost,
    )(x_r, bt)

    # (N, 2*M, W*H) -> (N, 2*M, W, H): free reshape, no transpose, no concat.
    return out.reshape(n, 2 * m, w, h)


def reference(x, B_scaled):
    n, c, w, h = x.shape
    m = B_scaled.shape[1]
    xf = jnp.transpose(x, (0, 2, 3, 1)).reshape(n * w * h, c)
    p = xf @ B_scaled
    p = p.reshape(n, w, h, m)
    p = jnp.transpose(p, (0, 3, 1, 2))
    p = 2.0 * jnp.pi * p
    return jnp.concatenate([jnp.sin(p), jnp.cos(p)], axis=1)


if __name__ == "__main__":
    key = jax.random.PRNGKey(0)
    k_x, k_b = jax.random.split(key)

    # small shapes consistent with the module
    batch, channels, width, height = 2, 4, 16, 16
    mapping_size = 32
    scale = 10.0

    x = jax.random.normal(k_x, (batch, channels, width, height), dtype=jnp.float32)
    # module __init__: self._B = B * scale, B of shape (num_input_channels, mapping_size)
    B_mat = jax.random.normal(k_b, (channels, mapping_size), dtype=jnp.float32)
    B_scaled = B_mat * scale

    out = gaussian_fourier_feature_transform(x, B_scaled)
    out = jax.block_until_ready(out)

    ref = reference(x, B_scaled)
    assert out.shape == (batch, 2 * mapping_size, width, height), out.shape
    assert jnp.allclose(out, ref, atol=1e-3, rtol=1e-3), float(jnp.max(jnp.abs(out - ref)))

    print("KERNEL_OK")
</pallas_src>

<mosaic_0001>
module attributes {stable_mosaic.version = 11 : i64} {
  func.func @gfft_kernel(%arg0: i32, %arg1: i32, %arg2: memref<1x4x256xf32, #tpu.memory_space<vmem>>, %arg3: memref<32x4xf32, #tpu.memory_space<vmem>>, %arg4: memref<1x64x256xf32, #tpu.memory_space<vmem>>) attributes {dimension_semantics = [#tpu.dimension_semantics<parallel>, #tpu.dimension_semantics<parallel>], iteration_bounds = array<i64: 2, 1>, scalar_prefetch = 0 : i64, scratch_operands = 0 : i64, tpu.core_type = #tpu.core_type<tc>, window_params = [{transform_indices = @transform_0, window_bounds = array<i64: 1, 4, 256>}, {pipeline_mode = #tpu.pipeline_mode<synchronous>, transform_indices = @transform_1, window_bounds = array<i64: 32, 4>}, {transform_indices = @transform_2, window_bounds = array<i64: 1, 64, 256>}]} {
    %c0 = arith.constant 0 : index
    %c0_0 = arith.constant 0 : index
    %0 = vector.load %arg3[%c0, %c0_0] : memref<32x4xf32, #tpu.memory_space<vmem>>, vector<32x4xf32>
    %c0_1 = arith.constant 0 : index
    %c0_2 = arith.constant 0 : index
    %c0_3 = arith.constant 0 : index
    %1 = vector.load %arg2[%c0_1, %c0_2, %c0_3] : memref<1x4x256xf32, #tpu.memory_space<vmem>>, vector<1x4x256xf32>
    %2 = vector.shape_cast %1 : vector<1x4x256xf32> to vector<4x256xf32>
    %cst = arith.constant dense<0.000000e+00> : vector<32x256xf32>
    %3 = tpu.matmul %0, %2, %cst {dimension_numbers = #tpu.dot_dimension_numbers<[1], [0], [0], [1], [0, 0, 1, 1], [], []>} : vector<32x4xf32>, vector<4x256xf32>, vector<32x256xf32> -> vector<32x256xf32>
    %4 = math.sin %3 : vector<32x256xf32>
    %c0_4 = arith.constant 0 : index
    %c0_5 = arith.constant 0 : index
    %c0_6 = arith.constant 0 : index
    %5 = vector.load %arg4[%c0_4, %c0_5, %c0_6] : memref<1x64x256xf32, #tpu.memory_space<vmem>>, vector<1x32x256xf32>
    %6 = vector.shape_cast %5 : vector<1x32x256xf32> to vector<32x256xf32>
    %7 = vector.shape_cast %4 : vector<32x256xf32> to vector<1x32x256xf32>
    tpu.vector_store %arg4[%c0_4, %c0_5, %c0_6], %7 {strides = array<i32>} : memref<1x64x256xf32, #tpu.memory_space<vmem>>, vector<1x32x256xf32>,
    %8 = math.cos %3 : vector<32x256xf32>
    %c0_7 = arith.constant 0 : index
    %c32 = arith.constant 32 : index
    %c0_8 = arith.constant 0 : index
    %9 = vector.load %arg4[%c0_7, %c32, %c0_8] : memref<1x64x256xf32, #tpu.memory_space<vmem>>, vector<1x32x256xf32>
    %10 = vector.shape_cast %9 : vector<1x32x256xf32> to vector<32x256xf32>
    %11 = vector.shape_cast %8 : vector<32x256xf32> to vector<1x32x256xf32>
    tpu.vector_store %arg4[%c0_7, %c32, %c0_8], %11 {strides = array<i32>} : memref<1x64x256xf32, #tpu.memory_space<vmem>>, vector<1x32x256xf32>,
    return
  }
  func.func @transform_0(%arg0: i32, %arg1: i32) -> (i32, i32, i32) {
    %c0_i32 = arith.constant 0 : i32
    %c0_i32_0 = arith.constant 0 : i32
    return %arg0, %c0_i32, %arg1 : i32, i32, i32
  }
  func.func @transform_1(%arg0: i32, %arg1: i32) -> (i32, i32) {
    %c0_i32 = arith.constant 0 : i32
    %c0_i32_0 = arith.constant 0 : i32
    %c0_i32_1 = arith.constant 0 : i32
    return %c0_i32, %c0_i32_0 : i32, i32
  }
  func.func @transform_2(%arg0: i32, %arg1: i32) -> (i32, i32, i32) {
    %c0_i32 = arith.constant 0 : i32
    %c0_i32_0 = arith.constant 0 : i32
    return %arg0, %c0_i32, %arg1 : i32, i32, i32
  }
}

</mosaic_0001>

<llo_original>
// kernel: tpu_custom_call.1
$region0: #{tpu_custom_call.1}
  #allocation0 [shape = 'u32[]', space=smem, size = 0x4, offset = 0x4, fixed_abs, tag = 'smem constant byte address 0x4 - core index']
  #allocation1 [shape = 'u32[144,128]{1,0:T(1,128)}', space=vmem, size = 0x12000, scoped, tag = 'internal scratch']
  %s0 = inlined_call_operand.vmem [shape: f32[2,4,256], index: 0, kind: input, shape index: {}]
  %s1 = inlined_call_operand.vmem [shape: f32[32,4], index: 1, kind: input, shape index: {}]
  %s2 = inlined_call_operand.hbm [shape: f32[2,64,256], index: 2, kind: output, shape index: {}]
  %s3 = sld [smem:[#allocation0]]
  $region41: #{tpu_custom_call.1} parent=0
    _
  %s5 = ssub.s32 1, %s3
  %s6 = scalar_select 0, %s5, %s3
  $region1: #{tpu_custom_call.1} parent=0
    #allocation2 [shape = 'u8[131072]{0}', space=vmem, size = 0x20000, scoped, tag = 'output window, operand 0']
    #allocation3 [shape = 's32[2]{0}', space=sflag, size = 0x8, scoped, tag = 'scoped memory for tpu_custom_call.1']
    %7 = vsyncpa [#allocation3], 0
    %s8 = scalar_lea.sflag [#allocation3], 1
    %9 = vsyncpa %s8, 0
    loop: start=0, step=1, limit=4
    $region2: #{tpu_custom_call.1} parent=1 // loop_pre_header
      _
    $region3: #{tpu_custom_call.1} parent=1 // loop_header
      %s11 = sphi 0, %s15
      %p12 = scmp.ge.s32.totalorder %s11, 4
      %s18 = sphi 0, %s30
      %s19 = sphi 0, %s26
      %s20 = sphi 0, %s18
      %s21 = sphi 0, %s19
      %s22 = sphi 0, %s20
      %s23 = sphi 0, %s21
      %s35 = sphi 0, %s37
      %s38 = sphi 0, %s35
      %s39 = sphi 0, %s38
      %s55 = sphi 0, %s39
      %s59 = sphi 0, %s59
      %s61 = sphi 0, %s59
      %s62 = sphi 0, %s61
      %s76 = sphi 0, %s62
      %s84 = sphi 0, %s86
      %s87 = sphi 0, %s84
      %s88 = sphi 0, %s87
      %s104 = sphi 0, %s88
    $region4: #{tpu_custom_call.1} parent=1 // loop_header_branch
      %14 = sbr.rel (%p12) target = $region8
    $region5: #{tpu_custom_call.1} parent=1 // loop_body
      %s16 = ssub.s32 %s11, 1
      %s17 = ssub.s32 %s11, 2
      %s24 = sadd.s32 1, %s19
      %p25 = scmp.ge.s32.totalorder %s24, 1
      %s26 = scalar_select %p25, 0, %s24
      %s27 = sadd.s32 1, %s18
      %s28 = scalar_select %p25, %s27, %s18
      %p29 = scmp.ge.s32.totalorder %s28, 2
      %s30 = scalar_select %p29, 0, %s28
      %s31 = ssub.s32 %s18, %s30
      %s32 = ssub.s32 %s19, %s26
      %s33 = sor.u32 %s31, %s32
      %p34 = scmp.eq.s32.totalorder %s33, 0
      %s36 = sadd.s32 %s35, 1
      %s37 = scalar_select %p34, %s35, %s36
      %p40 = pneg %p34
      %p41 = scmp.eq.s32.totalorder %s11, 1
      %p42 = por %p40, %p41
      %p43 = scmp.ne.s32.totalorder %s35, %s38
      %p44 = scmp.eq.s32.totalorder %s11, 0
      %p45 = por %p43, %p44
      %p46 = scmp.ne.s32.totalorder %s35, %s38
      %p47 = scmp.eq.s32.totalorder %s16, 1
      %p48 = por %p46, %p47
      %p49 = scmp.ne.s32.totalorder %s38, %s39
      %p50 = scmp.eq.s32.totalorder %s16, 0
      %p51 = por %p49, %p50
      %p52 = scmp.ne.s32.totalorder %s38, %s39
      %p53 = scmp.eq.s32.totalorder %s17, 1
      %p54 = por %p52, %p53
      %p56 = scmp.ne.s32.totalorder %s39, %s55
      %p57 = scmp.eq.s32.totalorder %s17, 0
      %p58 = por %p56, %p57
      %s60 = sadd.s32 %s59, 1
      %p63 = scmp.eq.s32.totalorder %s11, 1
      %p64 = scmp.ne.s32.totalorder %s59, %s61
      %p65 = scmp.eq.s32.totalorder %s11, 0
      %p66 = por %p64, %p65
      %p67 = scmp.ne.s32.totalorder %s59, %s61
      %p68 = scmp.eq.s32.totalorder %s16, 1
      %p69 = por %p67, %p68
      %p70 = scmp.ne.s32.totalorder %s61, %s62
      %p71 = scmp.eq.s32.totalorder %s16, 0
      %p72 = por %p70, %p71
      %p73 = scmp.ne.s32.totalorder %s61, %s62
      %p74 = scmp.eq.s32.totalorder %s17, 1
      %p75 = por %p73, %p74
      %p77 = scmp.ne.s32.totalorder %s62, %s76
      %p78 = scmp.eq.s32.totalorder %s17, 0
      %p79 = por %p77, %p78
      %s80 = ssub.s32 %s18, %s30
      %s81 = ssub.s32 %s19, %s26
      %s82 = sor.u32 %s80, %s81
      %p83 = scmp.eq.s32.totalorder %s82, 0
      %s85 = sadd.s32 %s84, 1
      %s86 = scalar_select %p83, %s84, %s85
      %p89 = pneg %p83
      %p90 = scmp.eq.s32.totalorder %s11, 1
      %p91 = por %p89, %p90
      %p92 = scmp.ne.s32.totalorder %s84, %s87
      %p93 = scmp.eq.s32.totalorder %s11, 0
      %p94 = por %p92, %p93
      %p95 = scmp.ne.s32.totalorder %s84, %s87
      %p96 = scmp.eq.s32.totalorder %s16, 1
      %p97 = por %p95, %p96
      %p98 = scmp.ne.s32.totalorder %s87, %s88
      %p99 = scmp.eq.s32.totalorder %s16, 0
      %p100 = por %p98, %p99
      %p101 = scmp.ne.s32.totalorder %s87, %s88
      %p102 = scmp.eq.s32.totalorder %s17, 1
      %p103 = por %p101, %p102
      %p105 = scmp.ne.s32.totalorder %s88, %s104
      %p106 = scmp.eq.s32.totalorder %s17, 0
      %p107 = por %p105, %p106
      %p108 = scmp.le.s32.totalorder 1, %s11
      %p109 = scmp.lt.s32.totalorder %s11, 3
      %p110 = pnand %p108, %p109
      %p111 = pneg %p110
      // Predicated region
      $region9: #{tpu_custom_call.1} parent=5 // pred_check
        _
      $region10: #{tpu_custom_call.1} parent=5 // pred_check_branch
        %113 = sbr.rel (%p110) target = $region12
      $region11: #{tpu_custom_call.1} parent=5 // pred_region
        %s114 = ssub.s32 %s11, 1
        // Predicated region
        $region13: #{tpu_custom_call.1} parent=11 // pred_check
          %p115 = pneg %p72
        $region14: #{tpu_custom_call.1} parent=11 // pred_check_branch
          %117 = sbr.rel (%p115) target = $region16
        $region15: #{tpu_custom_call.1} parent=11 // pred_region
          _
        $region16: #{tpu_custom_call.1} parent=11 // pred_fallthru
          _
      $region12: #{tpu_custom_call.1} parent=5 // pred_fallthru
        _
      %p118 = scmp.lt.s32.totalorder %s11, 2
      // Predicated region
      $region17: #{tpu_custom_call.1} parent=5 // pred_check
        %p119 = pneg %p118
      $region18: #{tpu_custom_call.1} parent=5 // pred_check_branch
        %121 = sbr.rel (%p119) target = $region20
      $region19: #{tpu_custom_call.1} parent=5 // pred_region
        // Predicated region
        $region21: #{tpu_custom_call.1} parent=19 // pred_check
          %p122 = pneg %p45
        $region22: #{tpu_custom_call.1} parent=19 // pred_check_branch
          %124 = sbr.rel (%p122) target = $region24
        $region23: #{tpu_custom_call.1} parent=19 // pred_region
          %s125 = smul.u32 2, %s19
          %p126 = scmp.lt.s32.totalorder %s18, 1
          %s127 = scalar_select %p126, %s18, 1
          %p128 = scmp.lt.s32.totalorder %s125, 1
          %s129 = scalar_select %p128, %s125, 1
          %s130 = smul.addr %s127, 2
          %s131 = sadd.s32 %s129, %s130
          %s132 = smul.addr %s131, 4
          %s133 = scalar_lea.vmem %s0, %s132
          %s134 = smul.u32 2, %s19
        $region24: #{tpu_custom_call.1} parent=19 // pred_fallthru
          _
      $region20: #{tpu_custom_call.1} parent=5 // pred_fallthru
        _
      %p135 = scmp.le.s32.totalorder 1, %s11
      %p136 = scmp.lt.s32.totalorder %s11, 3
      %p137 = pnand %p135, %p136
      %p138 = pneg %p137
      // Predicated region
      $region25: #{tpu_custom_call.1} parent=5 // pred_check
        _
      $region26: #{tpu_custom_call.1} parent=5 // pred_check_branch
        %140 = sbr.rel (%p137) target = $region28
      $region27: #{tpu_custom_call.1} parent=5 // pred_region
        %s141 = ssub.s32 %s11, 1
        %s142 = smul.u32 2, %s21
        %p143 = scmp.lt.s32.totalorder %s20, 1
        %s144 = scalar_select %p143, %s20, 1
        %p145 = scmp.lt.s32.totalorder %s142, 1
        %s146 = scalar_select %p145, %s142, 1
        %s147 = smul.addr %s144, 2
        %s148 = sadd.s32 %s146, %s147
        %s149 = smul.addr %s148, 4
        %s150 = scalar_lea.vmem %s0, %s149
        %p151 = pneg %p51
        %p152 = pneg %p48
        %p153 = pneg %p72
        %p154 = pneg %p69
        %p155 = pneg %p100
        %p156 = pneg %p97
        %s157 = sand.u32 %s87, 1
        %s158 = scalar_lea.sflag [#allocation3], %s157
        %s159 = sand.u32 %s87, 1
        %s160 = smul.addr %s159, 128
        %s161 = scalar_lea.vmem [#allocation2], %s160
        %s162 = smul.u32 2, %s21
        %p163 = scmp.lt.s32.totalorder %s20, 1
        %s164 = scalar_select %p163, %s20, 1
        %p165 = scmp.lt.s32.totalorder %s162, 1
        %s166 = scalar_select %p165, %s162, 1
        %s167 = smul.addr %s164, 2
        %s168 = sadd.s32 %s166, %s167
        %s169 = smul.addr %s168, 4
        %s170 = scalar_lea.vmem %s0, %s169
        %s171 = smul.u32 2, %s21
        %s172 = smul.u32 2, %s21
        %v173 = vld [vmem:[%s1] sm:$0xff]
        %v174 = vld [vmem:[%s1 + $0x8] sm:$0xff]
        %v175 = vld [vmem:[%s1 + $0x10] sm:$0xff]
        %v176 = vld [vmem:[%s1 + $0x18] sm:$0xff]
        %v177 = vld [vmem:[%s170] sm:$0xff]
        %v179 = vcombine.high %v177, %v177
        %vm180 = vcmask 31744
        %v182 = vsel %vm180, %v173, 0
        %v185 = vsel %vm180, %v174, 0
        %v188 = vsel %vm180, %v175, 0
        %v191 = vsel %vm180, %v176, 0
        %vm193 = vcmask 1043456
        %v194 = vsel %vm193, %v177, 0
        %v196 = vsel %vm193, %v179, 0
        %198 = vmatprep.subr.mxu0 %v196
        %199 = vmatpush1.msra.mxu0 %v194
        %200 = vmatprep.subr.mxu0 0.0
        %201 = vmatpush1.msra.mxu0 0.0
        %202 = vmatprep.subr.mxu0 0.0
        %203 = vmatpush1.msra.mxu0 0.0
        %204 = vmatprep.subr.mxu0 0.0
        %205 = vmatpush1.msra.mxu0 0.0
        %206 = vmatprep.subr.mxu0 0.0
        %207 = vmatpush1.msra.mxu0 0.0
        %208 = vmatprep.subr.mxu0 0.0
        %209 = vmatpush1.msra.mxu0 0.0
        %210 = vmatprep.subr.mxu0 0.0
        %211 = vmatpush1.msra.mxu0 0.0
        %212 = vmatprep.subr.mxu0 0.0
        %213 = vmatpush1.msra.mxu0 0.0
        %214 = vmatprep.subr.mxu0 0.0
        %215 = vmatpush1.msra.mxu0 0.0
        %216 = vmatprep.subr.mxu0 0.0
        %217 = vmatpush1.msra.mxu0 0.0
        %218 = vmatprep.subr.mxu0 0.0
        %219 = vmatpush1.msra.mxu0 0.0
        %220 = vmatprep.subr.mxu0 0.0
        %221 = vmatpush1.msra.mxu0 0.0
        %222 = vmatprep.subr.mxu0 0.0
        %223 = vmatpush1.msra.mxu0 0.0
        %224 = vmatprep.subr.mxu0 0.0
        %225 = vmatpush1.msra.mxu0 0.0
        %226 = vmatprep.subr.mxu0 0.0
        %227 = vmatpush1.msra.mxu0 0.0
        %228 = vmatprep.subr.mxu0 0.0
        %229 = vmatpush1.msra.mxu0 0.0
        %230 = vmatprep.subr.mxu0 0.0
        %231 = vmatpush1.msra.mxu0 0.0
        %232 = vmatprep.subr.mxu0 0.0
        %233 = vmatpush1.msra.mxu0 0.0
        %234 = vmatprep.subr.mxu0 0.0
        %235 = vmatpush1.msra.mxu0 0.0
        %236 = vmatprep.subr.mxu0 0.0
        %237 = vmatpush1.msra.mxu0 0.0
        %238 = vmatprep.subr.mxu0 0.0
        %239 = vmatpush1.msra.mxu0 0.0
        %240 = vmatprep.subr.mxu0 0.0
        %241 = vmatpush1.msra.mxu0 0.0
        %242 = vmatprep.subr.mxu0 0.0
        %243 = vmatpush1.msra.mxu0 0.0
        %244 = vmatprep.subr.mxu0 0.0
        %245 = vmatpush1.msra.mxu0 0.0
        %246 = vmatprep.subr.mxu0 0.0
        %247 = vmatpush1.msra.mxu0 0.0
        %248 = vmatprep.subr.mxu0 0.0
        %249 = vmatpush1.msra.mxu0 0.0
        %250 = vmatprep.subr.mxu0 0.0
        %251 = vmatpush1.msra.mxu0 0.0
        %252 = vmatprep.subr.mxu0 0.0
        %253 = vmatpush1.msra.mxu0 0.0
        %254 = vmatprep.subr.mxu0 0.0
        %255 = vmatpush1.msra.mxu0 0.0
        %256 = vmatprep.subr.mxu0 0.0
        %257 = vmatpush1.msra.mxu0 0.0
        %258 = vmatprep.subr.mxu0 0.0
        %259 = vmatpush1.msra.mxu0 0.0
        %260 = vmatprep.subr.mxu0 0.0
        %261 = vmatpush1.msra.mxu0 0.0
        %262 = vmatprep.mubr.f32.mxu0 0.0
        %263 = vmatmul.mubr.f32.gmra.mrb[0].mxu0 %v182
        %v264 = vpop.f32.mrb[0].mxu0
        %v265 = vadd.f32 0.0, %v264
        %v266 = vpop.f32.mrb[0].mxu0
        %v267 = vadd.f32 0.0, %v266
        %268 = vmatprep.mubr.f32.mxu0 0.0
        %269 = vmatmul.mubr.f32.gmra.mrb[0].mxu0 %v185
        %v270 = vpop.f32.mrb[0].mxu0
        %v271 = vadd.f32 0.0, %v270
        %v272 = vpop.f32.mrb[0].mxu0
        %v273 = vadd.f32 0.0, %v272
        %274 = vmatprep.mubr.f32.mxu0 0.0
        %275 = vmatmul.mubr.f32.gmra.mrb[0].mxu0 %v188
        %v276 = vpop.f32.mrb[0].mxu0
        %v277 = vadd.f32 0.0, %v276
        %v278 = vpop.f32.mrb[0].mxu0
        %v279 = vadd.f32 0.0, %v278
        %280 = vmatprep.mubr.f32.mxu0 0.0
        %281 = vmatmul.mubr.f32.gmra.mrb[0].mxu0 %v191
        %v282 = vpop.f32.mrb[0].mxu0
        %v283 = vadd.f32 0.0, %v282
        %v284 = vpop.f32.mrb[0].mxu0
        %v285 = vadd.f32 0.0, %v284
        %286 = vdwg.mxu0
        %v287 = vand.u32 2147483647, %v265
        %vm288 = vcmp.le.f32.partialorder %v287, 0.7853982
        %vm289 = vcmp.lt.s32.totalorder %v265, 0
        %v290 = vand.u32 %v265, 2139095040
        %v291 = vshrl.u32 %v290, 23
        %v292 = vsub.s32 %v291, 127
        %v293 = vand.u32 2147483647, %v265
        %v294 = vand.u32 %v293, 8388607
        %v295 = vor.u32 %v294, 8388608
        %v296 = vsub.s32 0, %v295
        %v297 = vadd.s32 %v292, 1
        %vm298 = vcmp.gt.s32.totalorder %v297, 0
        %v299 = vsel %vm298, %v297, 0
        %v300 = vshrl.u32 %v299, 5
        %v301 = vand.u32 %v299, 31
        %v302 = vsub.s32 32, %v301
        %v303 = vshrl.u32 683565275, %v302
        %v304 = vshll.u32 683565275, %v301
        %v305 = vshrl.u32 2475754826, %v302
        %v306 = vor.u32 %v304, %v305
        %v307 = vshll.u32 2475754826, %v301
        %v308 = vshrl.u32 2131351028, %v302
        %v309 = vor.u32 %v307, %v308
        %v310 = vshll.u32 2131351028, %v301
        %v311 = vshrl.u32 2102212464, %v302
        %v312 = vor.u32 %v310, %v311
        %v313 = vshll.u32 2102212464, %v301
        %v314 = vshrl.u32 920167782, %v302
        %v315 = vor.u32 %v313, %v314
        %v316 = vshll.u32 920167782, %v301
        %v317 = vshrl.u32 1326507024, %v302
        %v318 = vor.u32 %v316, %v317
        %vm319 = vcmp.lt.s32.totalorder %v300, 1
        %vm320 = vcmp.lt.s32.totalorder %v300, 2
        %vm321 = vcmp.lt.s32.totalorder %v300, 3
        %vm322 = vcmp.lt.s32.totalorder %v300, 4
        %v323 = vsel %vm319, %v303, %v306
        %v324 = vsel %vm322, %v312, 2102212464
        %v325 = vsel %vm321, %v309, %v324
        %v326 = vsel %vm320, %v323, %v325
        %v327 = vsel %vm319, %v306, %v309
        %v328 = vsel %vm322, %v315, 920167782
        %v329 = vsel %vm321, %v312, %v328
        %v330 = vsel %vm320, %v327, %v329
        %v331 = vsel %vm319, %v309, %v312
        %v332 = vsel %vm322, %v318, 1326507024
        %v333 = vsel %vm321, %v315, %v332
        %v334 = vsel %vm320, %v331, %v333
        %v335 = vshll.u32 %v295, 8
        %v336 = vmul.u32.u64.compose %v335, %v334
        %v337 = vextract.low.u32 %v336
        %v338 = vextract.high.u32 %v336
        %v339 = vmul.u32.u64.compose %v335, %v330
        %v340 = vextract.low.u32 %v339
        %v341 = vextract.high.u32 %v339
        %v342 = vmul.u32 %v335, %v326
        %v343 = vadd.s32 %v338, %v340
        %vm344 = vc.u32 %v338, %v340
        %v345 = vadd.s32 %v341, 1
        %v346 = vsel %vm344, %v345, %v341
        %v347 = vadd.s32 %v342, %v346
        %v348 = vadd.s32 %v347, 536870912
        %v349 = vshrl.u32 %v348, 30
        %v350 = vshll.u32 %v349, 30
        %v351 = vsub.s32 %v347, %v350
        %vm352 = vcmp.lt.s32.totalorder %v351, 0
        %v353 = vsub.s32 0, %v351
        %v354 = vsel %vm352, %v353, %v351
        %v355 = vclz %v354
        %v356 = vsub.s32 %v355, 2
        %vm357 = vcmp.gt.s32.totalorder 0, %v356
        %v358 = vsel %vm357, 0, %v356
        %v359 = vsub.s32 32, %v358
        %v360 = vshll.u32 %v351, %v358
        %v361 = vshrl.u32 %v343, %v359
        %v362 = vor.u32 %v360, %v361
        %v363 = vsub.s32 4294967266, %v358
        %v364 = vadd.s32 %v363, 127
        %v365 = vshll.u32 %v364, 23
        %v366 = vor.u32 4788187, %v365
        %v367 = vand.u32 2147483647, %v366
        %v369 = vcvt.s32.f32 %v362
        %v370 = vmul.f32 %v369, %v367
        %v371 = vxor.u32 %v370, 2147483648
        %v372 = vsel %vm289, %v371, %v370
        %v373 = vsub.s32 4, %v349
        %v374 = vsel %vm289, %v373, %v349
        %v375 = vsel %vm288, %v265, %v372
        %v376 = vsel %vm288, 0, %v374
        %v377 = vcosq.f32.pop %v375
        %v378 = vsinq.f32.pop %v375
        %vm379 = vweird.f32 %v265
        %v380 = vadd.s32 %v376, 3
        %v381 = vand.u32 %v380, 3
        %vm382 = vcmp.lt.s32.totalorder %v381, 2
        %vm383 = vcmp.eq.s32.totalorder %v381, 0
        %v384 = vxor.u32 %v378, 2147483648
        %v385 = vsel %vm383, %v377, %v384
        %vm386 = vcmp.eq.s32.totalorder %v381, 2
        %v387 = vxor.u32 %v377, 2147483648
        %v388 = vsel %vm386, %v387, %v378
        %v389 = vsel %vm382, %v385, %v388
        %v390 = vsel %vm379, nan, %v389
        %v391 = vand.u32 2147483647, %v267
        %vm392 = vcmp.le.f32.partialorder %v391, 0.7853982
        %vm393 = vcmp.lt.s32.totalorder %v267, 0
        %v394 = vand.u32 %v267, 2139095040
        %v395 = vshrl.u32 %v394, 23
        %v396 = vsub.s32 %v395, 127
        %v397 = vand.u32 2147483647, %v267
        %v398 = vand.u32 %v397, 8388607
        %v399 = vor.u32 %v398, 8388608
        %v400 = vsub.s32 0, %v399
        %v401 = vadd.s32 %v396, 1
        %vm402 = vcmp.gt.s32.totalorder %v401, 0
        %v403 = vsel %vm402, %v401, 0
        %v404 = vshrl.u32 %v403, 5
        %v405 = vand.u32 %v403, 31
        %v406 = vsub.s32 32, %v405
        %v407 = vshrl.u32 683565275, %v406
        %v408 = vshll.u32 683565275, %v405
        %v409 = vshrl.u32 2475754826, %v406
        %v410 = vor.u32 %v408, %v409
        %v411 = vshll.u32 2475754826, %v405
        %v412 = vshrl.u32 2131351028, %v406
        %v413 = vor.u32 %v411, %v412
        %v414 = vshll.u32 2131351028, %v405
        %v415 = vshrl.u32 2102212464, %v406
        %v416 = vor.u32 %v414, %v415
        %v417 = vshll.u32 2102212464, %v405
        %v418 = vshrl.u32 920167782, %v406
        %v419 = vor.u32 %v417, %v418
        %v420 = vshll.u32 920167782, %v405
        %v421 = vshrl.u32 1326507024, %v406
        %v422 = vor.u32 %v420, %v421
        %vm423 = vcmp.lt.s32.totalorder %v404, 1
        %vm424 = vcmp.lt.s32.totalorder %v404, 2
        %vm425 = vcmp.lt.s32.totalorder %v404, 3
        %vm426 = vcmp.lt.s32.totalorder %v404, 4
        %v427 = vsel %vm423, %v407, %v410
        %v428 = vsel %vm426, %v416, 2102212464
        %v429 = vsel %vm425, %v413, %v428
        %v430 = vsel %vm424, %v427, %v429
        %v431 = vsel %vm423, %v410, %v413
        %v432 = vsel %vm426, %v419, 920167782
        %v433 = vsel %vm425, %v416, %v432
        %v434 = vsel %vm424, %v431, %v433
        %v435 = vsel %vm423, %v413, %v416
        %v436 = vsel %vm426, %v422, 1326507024
        %v437 = vsel %vm425, %v419, %v436
        %v438 = vsel %vm424, %v435, %v437
        %v439 = vshll.u32 %v399, 8
        %v440 = vmul.u32.u64.compose %v439, %v438
        %v441 = vextract.low.u32 %v440
        %v442 = vextract.high.u32 %v440
        %v443 = vmul.u32.u64.compose %v439, %v434
        %v444 = vextract.low.u32 %v443
        %v445 = vextract.high.u32 %v443
        %v446 = vmul.u32 %v439, %v430
        %v447 = vadd.s32 %v442, %v444
        %vm448 = vc.u32 %v442, %v444
        %v449 = vadd.s32 %v445, 1
        %v450 = vsel %vm448, %v449, %v445
        %v451 = vadd.s32 %v446, %v450
        %v452 = vadd.s32 %v451, 536870912
        %v453 = vshrl.u32 %v452, 30
        %v454 = vshll.u32 %v453, 30
        %v455 = vsub.s32 %v451, %v454
        %vm456 = vcmp.lt.s32.totalorder %v455, 0
        %v457 = vsub.s32 0, %v455
        %v458 = vsel %vm456, %v457, %v455
        %v459 = vclz %v458
        %v460 = vsub.s32 %v459, 2
        %vm461 = vcmp.gt.s32.totalorder 0, %v460
        %v462 = vsel %vm461, 0, %v460
        %v463 = vsub.s32 32, %v462
        %v464 = vshll.u32 %v455, %v462
        %v465 = vshrl.u32 %v447, %v463
        %v466 = vor.u32 %v464, %v465
        %v467 = vsub.s32 4294967266, %v462
        %v468 = vadd.s32 %v467, 127
        %v469 = vshll.u32 %v468, 23
        %v470 = vor.u32 4788187, %v469
        %v471 = vand.u32 2147483647, %v470
        %v473 = vcvt.s32.f32 %v466
        %v474 = vmul.f32 %v473, %v471
        %v475 = vxor.u32 %v474, 2147483648
        %v476 = vsel %vm393, %v475, %v474
        %v477 = vsub.s32 4, %v453
        %v478 = vsel %vm393, %v477, %v453
        %v479 = vsel %vm392, %v267, %v476
        %v480 = vsel %vm392, 0, %v478
        %v481 = vcosq.f32.pop %v479
        %v482 = vsinq.f32.pop %v479
        %vm483 = vweird.f32 %v267
        %v484 = vadd.s32 %v480, 3
        %v485 = vand.u32 %v484, 3
        %vm486 = vcmp.lt.s32.totalorder %v485, 2
        %vm487 = vcmp.eq.s32.totalorder %v485, 0
        %v488 = vxor.u32 %v482, 2147483648
        %v489 = vsel %vm487, %v481, %v488
        %vm490 = vcmp.eq.s32.totalorder %v485, 2
        %v491 = vxor.u32 %v481, 2147483648
        %v492 = vsel %vm490, %v491, %v482
        %v493 = vsel %vm486, %v489, %v492
        %v494 = vsel %vm483, nan, %v493
        %v495 = vand.u32 2147483647, %v271
        %vm496 = vcmp.le.f32.partialorder %v495, 0.7853982
        %vm497 = vcmp.lt.s32.totalorder %v271, 0
        %v498 = vand.u32 %v271, 2139095040
        %v499 = vshrl.u32 %v498, 23
        %v500 = vsub.s32 %v499, 127
        %v501 = vand.u32 2147483647, %v271
        %v502 = vand.u32 %v501, 8388607
        %v503 = vor.u32 %v502, 8388608
        %v504 = vsub.s32 0, %v503
        %v505 = vadd.s32 %v500, 1
        %vm506 = vcmp.gt.s32.totalorder %v505, 0
        %v507 = vsel %vm506, %v505, 0
        %v508 = vshrl.u32 %v507, 5
        %v509 = vand.u32 %v507, 31
        %v510 = vsub.s32 32, %v509
        %v511 = vshrl.u32 683565275, %v510
        %v512 = vshll.u32 683565275, %v509
        %v513 = vshrl.u32 2475754826, %v510
        %v514 = vor.u32 %v512, %v513
        %v515 = vshll.u32 2475754826, %v509
        %v516 = vshrl.u32 2131351028, %v510
        %v517 = vor.u32 %v515, %v516
        %v518 = vshll.u32 2131351028, %v509
        %v519 = vshrl.u32 2102212464, %v510
        %v520 = vor.u32 %v518, %v519
        %v521 = vshll.u32 2102212464, %v509
        %v522 = vshrl.u32 920167782, %v510
        %v523 = vor.u32 %v521, %v522
        %v524 = vshll.u32 920167782, %v509
        %v525 = vshrl.u32 1326507024, %v510
        %v526 = vor.u32 %v524, %v525
        %vm527 = vcmp.lt.s32.totalorder %v508, 1
        %vm528 = vcmp.lt.s32.totalorder %v508, 2
        %vm529 = vcmp.lt.s32.totalorder %v508, 3
        %vm530 = vcmp.lt.s32.totalorder %v508, 4
        %v531 = vsel %vm527, %v511, %v514
        %v532 = vsel %vm530, %v520, 2102212464
        %v533 = vsel %vm529, %v517, %v532
        %v534 = vsel %vm528, %v531, %v533
        %v535 = vsel %vm527, %v514, %v517
        %v536 = vsel %vm530, %v523, 920167782
        %v537 = vsel %vm529, %v520, %v536
        %v538 = vsel %vm528, %v535, %v537
        %v539 = vsel %vm527, %v517, %v520
        %v540 = vsel %vm530, %v526, 1326507024
        %v541 = vsel %vm529, %v523, %v540
        %v542 = vsel %vm528, %v539, %v541
        %v543 = vshll.u32 %v503, 8
        %v544 = vmul.u32.u64.compose %v543, %v542
        %v545 = vextract.low.u32 %v544
        %v546 = vextract.high.u32 %v544
        %v547 = vmul.u32.u64.compose %v543, %v538
        %v548 = vextract.low.u32 %v547
        %v549 = vextract.high.u32 %v547
        %v550 = vmul.u32 %v543, %v534
        %v551 = vadd.s32 %v546, %v548
        %vm552 = vc.u32 %v546, %v548
        %v553 = vadd.s32 %v549, 1
        %v554 = vsel %vm552, %v553, %v549
        %v555 = vadd.s32 %v550, %v554
        %v556 = vadd.s32 %v555, 536870912
        %v557 = vshrl.u32 %v556, 30
        %v558 = vshll.u32 %v557, 30
        %v559 = vsub.s32 %v555, %v558
        %vm560 = vcmp.lt.s32.totalorder %v559, 0
        %v561 = vsub.s32 0, %v559
        %v562 = vsel %vm560, %v561, %v559
        %v563 = vclz %v562
        %v564 = vsub.s32 %v563, 2
        %vm565 = vcmp.gt.s32.totalorder 0, %v564
        %v566 = vsel %vm565, 0, %v564
        %v567 = vsub.s32 32, %v566
        %v568 = vshll.u32 %v559, %v566
        %v569 = vshrl.u32 %v551, %v567
        %v570 = vor.u32 %v568, %v569
        %v571 = vsub.s32 4294967266, %v566
        %v572 = vadd.s32 %v571, 127
        %v573 = vshll.u32 %v572, 23
        %v574 = vor.u32 4788187, %v573
        %v575 = vand.u32 2147483647, %v574
        %v577 = vcvt.s32.f32 %v570
        %v578 = vmul.f32 %v577, %v575
        %v579 = vxor.u32 %v578, 2147483648
        %v580 = vsel %vm497, %v579, %v578
        %v581 = vsub.s32 4, %v557
        %v582 = vsel %vm497, %v581, %v557
        %v583 = vsel %vm496, %v271, %v580
        %v584 = vsel %vm496, 0, %v582
        %v585 = vcosq.f32.pop %v583
        %v586 = vsinq.f32.pop %v583
        %vm587 = vweird.f32 %v271
        %v588 = vadd.s32 %v584, 3
        %v589 = vand.u32 %v588, 3
        %vm590 = vcmp.lt.s32.totalorder %v589, 2
        %vm591 = vcmp.eq.s32.totalorder %v589, 0
        %v592 = vxor.u32 %v586, 2147483648
        %v593 = vsel %vm591, %v585, %v592
        %vm594 = vcmp.eq.s32.totalorder %v589, 2
        %v595 = vxor.u32 %v585, 2147483648
        %v596 = vsel %vm594, %v595, %v586
        %v597 = vsel %vm590, %v593, %v596
        %v598 = vsel %vm587, nan, %v597
        %v599 = vand.u32 2147483647, %v273
        %vm600 = vcmp.le.f32.partialorder %v599, 0.7853982
        %vm601 = vcmp.lt.s32.totalorder %v273, 0
        %v602 = vand.u32 %v273, 2139095040
        %v603 = vshrl.u32 %v602, 23
        %v604 = vsub.s32 %v603, 127
        %v605 = vand.u32 2147483647, %v273
        %v606 = vand.u32 %v605, 8388607
        %v607 = vor.u32 %v606, 8388608
        %v608 = vsub.s32 0, %v607
        %v609 = vadd.s32 %v604, 1
        %vm610 = vcmp.gt.s32.totalorder %v609, 0
        %v611 = vsel %vm610, %v609, 0
        %v612 = vshrl.u32 %v611, 5
        %v613 = vand.u32 %v611, 31
        %v614 = vsub.s32 32, %v613
        %v615 = vshrl.u32 683565275, %v614
        %v616 = vshll.u32 683565275, %v613
        %v617 = vshrl.u32 2475754826, %v614
        %v618 = vor.u32 %v616, %v617
        %v619 = vshll.u32 2475754826, %v613
        %v620 = vshrl.u32 2131351028, %v614
        %v621 = vor.u32 %v619, %v620
        %v622 = vshll.u32 2131351028, %v613
        %v623 = vshrl.u32 2102212464, %v614
        %v624 = vor.u32 %v622, %v623
        %v625 = vshll.u32 2102212464, %v613
        %v626 = vshrl.u32 920167782, %v614
        %v627 = vor.u32 %v625, %v626
        %v628 = vshll.u32 920167782, %v613
        %v629 = vshrl.u32 1326507024, %v614
        %v630 = vor.u32 %v628, %v629
        %vm631 = vcmp.lt.s32.totalorder %v612, 1
        %vm632 = vcmp.lt.s32.totalorder %v612, 2
        %vm633 = vcmp.lt.s32.totalorder %v612, 3
        %vm634 = vcmp.lt.s32.totalorder %v612, 4
        %v635 = vsel %vm631, %v615, %v618
        %v636 = vsel %vm634, %v624, 2102212464
        %v637 = vsel %vm633, %v621, %v636
        %v638 = vsel %vm632, %v635, %v637
        %v639 = vsel %vm631, %v618, %v621
        %v640 = vsel %vm634, %v627, 920167782
        %v641 = vsel %vm633, %v624, %v640
        %v642 = vsel %vm632, %v639, %v641
        %v643 = vsel %vm631, %v621, %v624
        %v644 = vsel %vm634, %v630, 1326507024
        %v645 = vsel %vm633, %v627, %v644
        %v646 = vsel %vm632, %v643, %v645
        %v647 = vshll.u32 %v607, 8
        %v648 = vmul.u32.u64.compose %v647, %v646
        %v649 = vextract.low.u32 %v648
        %v650 = vextract.high.u32 %v648
        %v651 = vmul.u32.u64.compose %v647, %v642
        %v652 = vextract.low.u32 %v651
        %v653 = vextract.high.u32 %v651
        %v654 = vmul.u32 %v647, %v638
        %v655 = vadd.s32 %v650, %v652
        %vm656 = vc.u32 %v650, %v652
        %v657 = vadd.s32 %v653, 1
        %v658 = vsel %vm656, %v657, %v653
        %v659 = vadd.s32 %v654, %v658
        %v660 = vadd.s32 %v659, 536870912
        %v661 = vshrl.u32 %v660, 30
        %v662 = vshll.u32 %v661, 30
        %v663 = vsub.s32 %v659, %v662
        %vm664 = vcmp.lt.s32.totalorder %v663, 0
        %v665 = vsub.s32 0, %v663
        %v666 = vsel %vm664, %v665, %v663
        %v667 = vclz %v666
        %v668 = vsub.s32 %v667, 2
        %vm669 = vcmp.gt.s32.totalorder 0, %v668
        %v670 = vsel %vm669, 0, %v668
        %v671 = vsub.s32 32, %v670
        %v672 = vshll.u32 %v663, %v670
        %v673 = vshrl.u32 %v655, %v671
        %v674 = vor.u32 %v672, %v673
        %v675 = vsub.s32 4294967266, %v670
        %v676 = vadd.s32 %v675, 127
        %v677 = vshll.u32 %v676, 23
        %v678 = vor.u32 4788187, %v677
        %v679 = vand.u32 2147483647, %v678
        %v681 = vcvt.s32.f32 %v674
        %v682 = vmul.f32 %v681, %v679
        %v683 = vxor.u32 %v682, 2147483648
        %v684 = vsel %vm601, %v683, %v682
        %v685 = vsub.s32 4, %v661
        %v686 = vsel %vm601, %v685, %v661
        %v687 = vsel %vm600, %v273, %v684
        %v688 = vsel %vm600, 0, %v686
        %v689 = vcosq.f32.pop %v687
        %v690 = vsinq.f32.pop %v687
        %vm691 = vweird.f32 %v273
        %v692 = vadd.s32 %v688, 3
        %v693 = vand.u32 %v692, 3
        %vm694 = vcmp.lt.s32.totalorder %v693, 2
        %vm695 = vcmp.eq.s32.totalorder %v693, 0
        %v696 = vxor.u32 %v690, 2147483648
        %v697 = vsel %vm695, %v689, %v696
        %vm698 = vcmp.eq.s32.totalorder %v693, 2
        %v699 = vxor.u32 %v689, 2147483648
        %v700 = vsel %vm698, %v699, %v690
        %v701 = vsel %vm694, %v697, %v700
        %v702 = vsel %vm691, nan, %v701
        %v703 = vand.u32 2147483647, %v277
        %vm704 = vcmp.le.f32.partialorder %v703, 0.7853982
        %vm705 = vcmp.lt.s32.totalorder %v277, 0
        %v706 = vand.u32 %v277, 2139095040
        %v707 = vshrl.u32 %v706, 23
        %v708 = vsub.s32 %v707, 127
        %v709 = vand.u32 2147483647, %v277
        %v710 = vand.u32 %v709, 8388607
        %v711 = vor.u32 %v710, 8388608
        %v712 = vsub.s32 0, %v711
        %v713 = vadd.s32 %v708, 1
        %vm714 = vcmp.gt.s32.totalorder %v713, 0
        %v715 = vsel %vm714, %v713, 0
        %v716 = vshrl.u32 %v715, 5
        %v717 = vand.u32 %v715, 31
        %v718 = vsub.s32 32, %v717
        %v719 = vshrl.u32 683565275, %v718
        %v720 = vshll.u32 683565275, %v717
        %v721 = vshrl.u32 2475754826, %v718
        %v722 = vor.u32 %v720, %v721
        %v723 = vshll.u32 2475754826, %v717
        %v724 = vshrl.u32 2131351028, %v718
        %v725 = vor.u32 %v723, %v724
        %v726 = vshll.u32 2131351028, %v717
        %v727 = vshrl.u32 2102212464, %v718
        %v728 = vor.u32 %v726, %v727
        %v729 = vshll.u32 2102212464, %v717
        %v730 = vshrl.u32 920167782, %v718
        %v731 = vor.u32 %v729, %v730
        %v732 = vshll.u32 920167782, %v717
        %v733 = vshrl.u32 1326507024, %v718
        %v734 = vor.u32 %v732, %v733
        %vm735 = vcmp.lt.s32.totalorder %v716, 1
        %vm736 = vcmp.lt.s32.totalorder %v716, 2
        %vm737 = vcmp.lt.s32.totalorder %v716, 3
        %vm738 = vcmp.lt.s32.totalorder %v716, 4
        %v739 = vsel %vm735, %v719, %v722
        %v740 = vsel %vm738, %v728, 2102212464
        %v741 = vsel %vm737, %v725, %v740
        %v742 = vsel %vm736, %v739, %v741
        %v743 = vsel %vm735, %v722, %v725
        %v744 = vsel %vm738, %v731, 920167782
        %v745 = vsel %vm737, %v728, %v744
        %v746 = vsel %vm736, %v743, %v745
        %v747 = vsel %vm735, %v725, %v728
        %v748 = vsel %vm738, %v734, 1326507024
        %v749 = vsel %vm737, %v731, %v748
        %v750 = vsel %vm736, %v747, %v749
        %v751 = vshll.u32 %v711, 8
        %v752 = vmul.u32.u64.compose %v751, %v750
        %v753 = vextract.low.u32 %v752
        %v754 = vextract.high.u32 %v752
        %v755 = vmul.u32.u64.compose %v751, %v746
        %v756 = vextract.low.u32 %v755
        %v757 = vextract.high.u32 %v755
        %v758 = vmul.u32 %v751, %v742
        %v759 = vadd.s32 %v754, %v756
        %vm760 = vc.u32 %v754, %v756
        %v761 = vadd.s32 %v757, 1
        %v762 = vsel %vm760, %v761, %v757
        %v763 = vadd.s32 %v758, %v762
        %v764 = vadd.s32 %v763, 536870912
        %v765 = vshrl.u32 %v764, 30
        %v766 = vshll.u32 %v765, 30
        %v767 = vsub.s32 %v763, %v766
        %vm768 = vcmp.lt.s32.totalorder %v767, 0
        %v769 = vsub.s32 0, %v767
        %v770 = vsel %vm768, %v769, %v767
        %v771 = vclz %v770
        %v772 = vsub.s32 %v771, 2
        %vm773 = vcmp.gt.s32.totalorder 0, %v772
        %v774 = vsel %vm773, 0, %v772
        %v775 = vsub.s32 32, %v774
        %v776 = vshll.u32 %v767, %v774
        %v777 = vshrl.u32 %v759, %v775
        %v778 = vor.u32 %v776, %v777
        %v779 = vsub.s32 4294967266, %v774
        %v780 = vadd.s32 %v779, 127
        %v781 = vshll.u32 %v780, 23
        %v782 = vor.u32 4788187, %v781
        %v783 = vand.u32 2147483647, %v782
        %v785 = vcvt.s32.f32 %v778
        %v786 = vmul.f32 %v785, %v783
        %v787 = vxor.u32 %v786, 2147483648
        %v788 = vsel %vm705, %v787, %v786
        %v789 = vsub.s32 4, %v765
        %v790 = vsel %vm705, %v789, %v765
        %v791 = vsel %vm704, %v277, %v788
        %v792 = vsel %vm704, 0, %v790
        %v793 = vcosq.f32.pop %v791
        %v794 = vsinq.f32.pop %v791
        %vm795 = vweird.f32 %v277
        %v796 = vadd.s32 %v792, 3
        %v797 = vand.u32 %v796, 3
        %vm798 = vcmp.lt.s32.totalorder %v797, 2
        %vm799 = vcmp.eq.s32.totalorder %v797, 0
        %v800 = vxor.u32 %v794, 2147483648
        %v801 = vsel %vm799, %v793, %v800
        %vm802 = vcmp.eq.s32.totalorder %v797, 2
        %v803 = vxor.u32 %v793, 2147483648
        %v804 = vsel %vm802, %v803, %v794
        %v805 = vsel %vm798, %v801, %v804
        %v806 = vsel %vm795, nan, %v805
        %v807 = vand.u32 2147483647, %v279
        %vm808 = vcmp.le.f32.partialorder %v807, 0.7853982
        %vm809 = vcmp.lt.s32.totalorder %v279, 0
        %v810 = vand.u32 %v279, 2139095040
        %v811 = vshrl.u32 %v810, 23
        %v812 = vsub.s32 %v811, 127
        %v813 = vand.u32 2147483647, %v279
        %v814 = vand.u32 %v813, 8388607
        %v815 = vor.u32 %v814, 8388608
        %v816 = vsub.s32 0, %v815
        %v817 = vadd.s32 %v812, 1
        %vm818 = vcmp.gt.s32.totalorder %v817, 0
        %v819 = vsel %vm818, %v817, 0
        %v820 = vshrl.u32 %v819, 5
        %v821 = vand.u32 %v819, 31
        %v822 = vsub.s32 32, %v821
        %v823 = vshrl.u32 683565275, %v822
        %v824 = vshll.u32 683565275, %v821
        %v825 = vshrl.u32 2475754826, %v822
        %v826 = vor.u32 %v824, %v825
        %v827 = vshll.u32 2475754826, %v821
        %v828 = vshrl.u32 2131351028, %v822
        %v829 = vor.u32 %v827, %v828
        %v830 = vshll.u32 2131351028, %v821
        %v831 = vshrl.u32 2102212464, %v822
        %v832 = vor.u32 %v830, %v831
        %v833 = vshll.u32 2102212464, %v821
        %v834 = vshrl.u32 920167782, %v822
        %v835 = vor.u32 %v833, %v834
        %v836 = vshll.u32 920167782, %v821
        %v837 = vshrl.u32 1326507024, %v822
        %v838 = vor.u32 %v836, %v837
        %vm839 = vcmp.lt.s32.totalorder %v820, 1
        %vm840 = vcmp.lt.s32.totalorder %v820, 2
        %vm841 = vcmp.lt.s32.totalorder %v820, 3
        %vm842 = vcmp.lt.s32.totalorder %v820, 4
        %v843 = vsel %vm839, %v823, %v826
        %v844 = vsel %vm842, %v832, 2102212464
        %v845 = vsel %vm841, %v829, %v844
        %v846 = vsel %vm840, %v843, %v845
        %v847 = vsel %vm839, %v826, %v829
        %v848 = vsel %vm842, %v835, 920167782
        %v849 = vsel %vm841, %v832, %v848
        %v850 = vsel %vm840, %v847, %v849
        %v851 = vsel %vm839, %v829, %v832
        %v852 = vsel %vm842, %v838, 1326507024
        %v853 = vsel %vm841, %v835, %v852
        %v854 = vsel %vm840, %v851, %v853
        %v855 = vshll.u32 %v815, 8
        %v856 = vmul.u32.u64.compose %v855, %v854
        %v857 = vextract.low.u32 %v856
        %v858 = vextract.high.u32 %v856
        %v859 = vmul.u32.u64.compose %v855, %v850
        %v860 = vextract.low.u32 %v859
        %v861 = vextract.high.u32 %v859
        %v862 = vmul.u32 %v855, %v846
        %v863 = vadd.s32 %v858, %v860
        %vm864 = vc.u32 %v858, %v860
        %v865 = vadd.s32 %v861, 1
        %v866 = vsel %vm864, %v865, %v861
        %v867 = vadd.s32 %v862, %v866
        %v868 = vadd.s32 %v867, 536870912
        %v869 = vshrl.u32 %v868, 30
        %v870 = vshll.u32 %v869, 30
        %v871 = vsub.s32 %v867, %v870
        %vm872 = vcmp.lt.s32.totalorder %v871, 0
        %v873 = vsub.s32 0, %v871
        %v874 = vsel %vm872, %v873, %v871
        %v875 = vclz %v874
        %v876 = vsub.s32 %v875, 2
        %vm877 = vcmp.gt.s32.totalorder 0, %v876
        %v878 = vsel %vm877, 0, %v876
        %v879 = vsub.s32 32, %v878
        %v880 = vshll.u32 %v871, %v878
        %v881 = vshrl.u32 %v863, %v879
        %v882 = vor.u32 %v880, %v881
        %v883 = vsub.s32 4294967266, %v878
        %v884 = vadd.s32 %v883, 127
        %v885 = vshll.u32 %v884, 23
        %v886 = vor.u32 4788187, %v885
        %v887 = vand.u32 2147483647, %v886
        %v889 = vcvt.s32.f32 %v882
        %v890 = vmul.f32 %v889, %v887
        %v891 = vxor.u32 %v890, 2147483648
        %v892 = vsel %vm809, %v891, %v890
        %v893 = vsub.s32 4, %v869
        %v894 = vsel %vm809, %v893, %v869
        %v895 = vsel %vm808, %v279, %v892
        %v896 = vsel %vm808, 0, %v894
        %v897 = vcosq.f32.pop %v895
        %v898 = vsinq.f32.pop %v895
        %vm899 = vweird.f32 %v279
        %v900 = vadd.s32 %v896, 3
        %v901 = vand.u32 %v900, 3
        %vm902 = vcmp.lt.s32.totalorder %v901, 2
        %vm903 = vcmp.eq.s32.totalorder %v901, 0
        %v904 = vxor.u32 %v898, 2147483648
        %v905 = vsel %vm903, %v897, %v904
        %vm906 = vcmp.eq.s32.totalorder %v901, 2
        %v907 = vxor.u32 %v897, 2147483648
        %v908 = vsel %vm906, %v907, %v898
        %v909 = vsel %vm902, %v905, %v908
        %v910 = vsel %vm899, nan, %v909
        %v911 = vand.u32 2147483647, %v283
        %vm912 = vcmp.le.f32.partialorder %v911, 0.7853982
        %vm913 = vcmp.lt.s32.totalorder %v283, 0
        %v914 = vand.u32 %v283, 2139095040
        %v915 = vshrl.u32 %v914, 23
        %v916 = vsub.s32 %v915, 127
        %v917 = vand.u32 2147483647, %v283
        %v918 = vand.u32 %v917, 8388607
        %v919 = vor.u32 %v918, 8388608
        %v920 = vsub.s32 0, %v919
        %v921 = vadd.s32 %v916, 1
        %vm922 = vcmp.gt.s32.totalorder %v921, 0
        %v923 = vsel %vm922, %v921, 0
        %v924 = vshrl.u32 %v923, 5
        %v925 = vand.u32 %v923, 31
        %v926 = vsub.s32 32, %v925
        %v927 = vshrl.u32 683565275, %v926
        %v928 = vshll.u32 683565275, %v925
        %v929 = vshrl.u32 2475754826, %v926
        %v930 = vor.u32 %v928, %v929
        %v931 = vshll.u32 2475754826, %v925
        %v932 = vshrl.u32 2131351028, %v926
        %v933 = vor.u32 %v931, %v932
        %v934 = vshll.u32 2131351028, %v925
        %v935 = vshrl.u32 2102212464, %v926
        %v936 = vor.u32 %v934, %v935
        %v937 = vshll.u32 2102212464, %v925
        %v938 = vshrl.u32 920167782, %v926
        %v939 = vor.u32 %v937, %v938
        %v940 = vshll.u32 920167782, %v925
        %v941 = vshrl.u32 1326507024, %v926
        %v942 = vor.u32 %v940, %v941
        %vm943 = vcmp.lt.s32.totalorder %v924, 1
        %vm944 = vcmp.lt.s32.totalorder %v924, 2
        %vm945 = vcmp.lt.s32.totalorder %v924, 3
        %vm946 = vcmp.lt.s32.totalorder %v924, 4
        %v947 = vsel %vm943, %v927, %v930
        %v948 = vsel %vm946, %v936, 2102212464
        %v949 = vsel %vm945, %v933, %v948
        %v950 = vsel %vm944, %v947, %v949
        %v951 = vsel %vm943, %v930, %v933
        %v952 = vsel %vm946, %v939, 920167782
        %v953 = vsel %vm945, %v936, %v952
        %v954 = vsel %vm944, %v951, %v953
        %v955 = vsel %vm943, %v933, %v936
        %v956 = vsel %vm946, %v942, 1326507024
        %v957 = vsel %vm945, %v939, %v956
        %v958 = vsel %vm944, %v955, %v957
        %v959 = vshll.u32 %v919, 8
        %v960 = vmul.u32.u64.compose %v959, %v958
        %v961 = vextract.low.u32 %v960
        %v962 = vextract.high.u32 %v960
        %v963 = vmul.u32.u64.compose %v959, %v954
        %v964 = vextract.low.u32 %v963
        %v965 = vextract.high.u32 %v963
        %v966 = vmul.u32 %v959, %v950
        %v967 = vadd.s32 %v962, %v964
        %vm968 = vc.u32 %v962, %v964
        %v969 = vadd.s32 %v965, 1
        %v970 = vsel %vm968, %v969, %v965
        %v971 = vadd.s32 %v966, %v970
        %v972 = vadd.s32 %v971, 536870912
        %v973 = vshrl.u32 %v972, 30
        %v974 = vshll.u32 %v973, 30
        %v975 = vsub.s32 %v971, %v974
        %vm976 = vcmp.lt.s32.totalorder %v975, 0
        %v977 = vsub.s32 0, %v975
        %v978 = vsel %vm976, %v977, %v975
        %v979 = vclz %v978
        %v980 = vsub.s32 %v979, 2
        %vm981 = vcmp.gt.s32.totalorder 0, %v980
        %v982 = vsel %vm981, 0, %v980
        %v983 = vsub.s32 32, %v982
        %v984 = vshll.u32 %v975, %v982
        %v985 = vshrl.u32 %v967, %v983
        %v986 = vor.u32 %v984, %v985
        %v987 = vsub.s32 4294967266, %v982
        %v988 = vadd.s32 %v987, 127
        %v989 = vshll.u32 %v988, 23
        %v990 = vor.u32 4788187, %v989
        %v991 = vand.u32 2147483647, %v990
        %v993 = vcvt.s32.f32 %v986
        %v994 = vmul.f32 %v993, %v991
        %v995 = vxor.u32 %v994, 2147483648
        %v996 = vsel %vm913, %v995, %v994
        %v997 = vsub.s32 4, %v973
        %v998 = vsel %vm913, %v997, %v973
        %v999 = vsel %vm912, %v283, %v996
        %v1000 = vsel %vm912, 0, %v998
        %v1001 = vcosq.f32.pop %v999
        %v1002 = vsinq.f32.pop %v999
        %vm1003 = vweird.f32 %v283
        %v1004 = vadd.s32 %v1000, 3
        %v1005 = vand.u32 %v1004, 3
        %vm1006 = vcmp.lt.s32.totalorder %v1005, 2
        %vm1007 = vcmp.eq.s32.totalorder %v1005, 0
        %v1008 = vxor.u32 %v1002, 2147483648
        %v1009 = vsel %vm1007, %v1001, %v1008
        %vm1010 = vcmp.eq.s32.totalorder %v1005, 2
        %v1011 = vxor.u32 %v1001, 2147483648
        %v1012 = vsel %vm1010, %v1011, %v1002
        %v1013 = vsel %vm1006, %v1009, %v1012
        %v1014 = vsel %vm1003, nan, %v1013
        %v1015 = vand.u32 2147483647, %v285
        %vm1016 = vcmp.le.f32.partialorder %v1015, 0.7853982
        %vm1017 = vcmp.lt.s32.totalorder %v285, 0
        %v1018 = vand.u32 %v285, 2139095040
        %v1019 = vshrl.u32 %v1018, 23
        %v1020 = vsub.s32 %v1019, 127
        %v1021 = vand.u32 2147483647, %v285
        %v1022 = vand.u32 %v1021, 8388607
        %v1023 = vor.u32 %v1022, 8388608
        %v1024 = vsub.s32 0, %v1023
        %v1025 = vadd.s32 %v1020, 1
        %vm1026 = vcmp.gt.s32.totalorder %v1025, 0
        %v1027 = vsel %vm1026, %v1025, 0
        %v1028 = vshrl.u32 %v1027, 5
        %v1029 = vand.u32 %v1027, 31
        %v1030 = vsub.s32 32, %v1029
        %v1031 = vshrl.u32 683565275, %v1030
        %v1032 = vshll.u32 683565275, %v1029
        %v1033 = vshrl.u32 2475754826, %v1030
        %v1034 = vor.u32 %v1032, %v1033
        %v1035 = vshll.u32 2475754826, %v1029
        %v1036 = vshrl.u32 2131351028, %v1030
        %v1037 = vor.u32 %v1035, %v1036
        %v1038 = vshll.u32 2131351028, %v1029
        %v1039 = vshrl.u32 2102212464, %v1030
        %v1040 = vor.u32 %v1038, %v1039
        %v1041 = vshll.u32 2102212464, %v1029
        %v1042 = vshrl.u32 920167782, %v1030
        %v1043 = vor.u32 %v1041, %v1042
        %v1044 = vshll.u32 920167782, %v1029
        %v1045 = vshrl.u32 1326507024, %v1030
        %v1046 = vor.u32 %v1044, %v1045
        %vm1047 = vcmp.lt.s32.totalorder %v1028, 1
        %vm1048 = vcmp.lt.s32.totalorder %v1028, 2
        %vm1049 = vcmp.lt.s32.totalorder %v1028, 3
        %vm1050 = vcmp.lt.s32.totalorder %v1028, 4
        %v1051 = vsel %vm1047, %v1031, %v1034
        %v1052 = vsel %vm1050, %v1040, 2102212464
        %v1053 = vsel %vm1049, %v1037, %v1052
        %v1054 = vsel %vm1048, %v1051, %v1053
        %v1055 = vsel %vm1047, %v1034, %v1037
        %v1056 = vsel %vm1050, %v1043, 920167782
        %v1057 = vsel %vm1049, %v1040, %v1056
        %v1058 = vsel %vm1048, %v1055, %v1057
        %v1059 = vsel %vm1047, %v1037, %v1040
        %v1060 = vsel %vm1050, %v1046, 1326507024
        %v1061 = vsel %vm1049, %v1043, %v1060
        %v1062 = vsel %vm1048, %v1059, %v1061
        %v1063 = vshll.u32 %v1023, 8
        %v1064 = vmul.u32.u64.compose %v1063, %v1062
        %v1065 = vextract.low.u32 %v1064
        %v1066 = vextract.high.u32 %v1064
        %v1067 = vmul.u32.u64.compose %v1063, %v1058
        %v1068 = vextract.low.u32 %v1067
        %v1069 = vextract.high.u32 %v1067
        %v1070 = vmul.u32 %v1063, %v1054
        %v1071 = vadd.s32 %v1066, %v1068
        %vm1072 = vc.u32 %v1066, %v1068
        %v1073 = vadd.s32 %v1069, 1
        %v1074 = vsel %vm1072, %v1073, %v1069
        %v1075 = vadd.s32 %v1070, %v1074
        %v1076 = vadd.s32 %v1075, 536870912
        %v1077 = vshrl.u32 %v1076, 30
        %v1078 = vshll.u32 %v1077, 30
        %v1079 = vsub.s32 %v1075, %v1078
        %vm1080 = vcmp.lt.s32.totalorder %v1079, 0
        %v1081 = vsub.s32 0, %v1079
        %v1082 = vsel %vm1080, %v1081, %v1079
        %v1083 = vclz %v1082
        %v1084 = vsub.s32 %v1083, 2
        %vm1085 = vcmp.gt.s32.totalorder 0, %v1084
        %v1086 = vsel %vm1085, 0, %v1084
        %v1087 = vsub.s32 32, %v1086
        %v1088 = vshll.u32 %v1079, %v1086
        %v1089 = vshrl.u32 %v1071, %v1087
        %v1090 = vor.u32 %v1088, %v1089
        %v1091 = vsub.s32 4294967266, %v1086
        %v1092 = vadd.s32 %v1091, 127
        %v1093 = vshll.u32 %v1092, 23
        %v1094 = vor.u32 4788187, %v1093
        %v1095 = vand.u32 2147483647, %v1094
        %v1097 = vcvt.s32.f32 %v1090
        %v1098 = vmul.f32 %v1097, %v1095
        %v1099 = vxor.u32 %v1098, 2147483648
        %v1100 = vsel %vm1017, %v1099, %v1098
        %v1101 = vsub.s32 4, %v1077
        %v1102 = vsel %vm1017, %v1101, %v1077
        %v1103 = vsel %vm1016, %v285, %v1100
        %v1104 = vsel %vm1016, 0, %v1102
        %v1105 = vcosq.f32.pop %v1103
        %v1106 = vsinq.f32.pop %v1103
        %vm1107 = vweird.f32 %v285
        %v1108 = vadd.s32 %v1104, 3
        %v1109 = vand.u32 %v1108, 3
        %vm1110 = vcmp.lt.s32.totalorder %v1109, 2
        %vm1111 = vcmp.eq.s32.totalorder %v1109, 0
        %v1112 = vxor.u32 %v1106, 2147483648
        %v1113 = vsel %vm1111, %v1105, %v1112
        %vm1114 = vcmp.eq.s32.totalorder %v1109, 2
        %v1115 = vxor.u32 %v1105, 2147483648
        %v1116 = vsel %vm1114, %v1115, %v1106
        %v1117 = vsel %vm1110, %v1113, %v1116
        %v1118 = vsel %vm1107, nan, %v1117
        %1119 = vst [vmem:[%s161] sm:$0xff] %v390
        %1120 = vst [vmem:[%s161 + $0x8] sm:$0xff] %v494
        %1121 = vst [vmem:[%s161 + $0x10] sm:$0xff] %v598
        %1122 = vst [vmem:[%s161 + $0x18] sm:$0xff] %v702
        %1123 = vst [vmem:[%s161 + $0x20] sm:$0xff] %v806
        %1124 = vst [vmem:[%s161 + $0x28] sm:$0xff] %v910
        %1125 = vst [vmem:[%s161 + $0x30] sm:$0xff] %v1014
        %1126 = vst [vmem:[%s161 + $0x38] sm:$0xff] %v1118
        %v1127 = vand.u32 2147483647, %v265
        %vm1128 = vcmp.le.f32.partialorder %v1127, 0.7853982
        %vm1129 = vcmp.lt.s32.totalorder %v265, 0
        %v1130 = vand.u32 %v265, 2139095040
        %v1131 = vshrl.u32 %v1130, 23
        %v1132 = vsub.s32 %v1131, 127
        %v1133 = vand.u32 2147483647, %v265
        %v1134 = vand.u32 %v1133, 8388607
        %v1135 = vor.u32 %v1134, 8388608
        %v1136 = vsub.s32 0, %v1135
        %v1137 = vadd.s32 %v1132, 1
        %vm1138 = vcmp.gt.s32.totalorder %v1137, 0
        %v1139 = vsel %vm1138, %v1137, 0
        %v1140 = vshrl.u32 %v1139, 5
        %v1141 = vand.u32 %v1139, 31
        %v1142 = vsub.s32 32, %v1141
        %v1143 = vshrl.u32 683565275, %v1142
        %v1144 = vshll.u32 683565275, %v1141
        %v1145 = vshrl.u32 2475754826, %v1142
        %v1146 = vor.u32 %v1144, %v1145
        %v1147 = vshll.u32 2475754826, %v1141
        %v1148 = vshrl.u32 2131351028, %v1142
        %v1149 = vor.u32 %v1147, %v1148
        %v1150 = vshll.u32 2131351028, %v1141
        %v1151 = vshrl.u32 2102212464, %v1142
        %v1152 = vor.u32 %v1150, %v1151
        %v1153 = vshll.u32 2102212464, %v1141
        %v1154 = vshrl.u32 920167782, %v1142
        %v1155 = vor.u32 %v1153, %v1154
        %v1156 = vshll.u32 920167782, %v1141
        %v1157 = vshrl.u32 1326507024, %v1142
        %v1158 = vor.u32 %v1156, %v1157
        %vm1159 = vcmp.lt.s32.totalorder %v1140, 1
        %vm1160 = vcmp.lt.s32.totalorder %v1140, 2
        %vm1161 = vcmp.lt.s32.totalorder %v1140, 3
        %vm1162 = vcmp.lt.s32.totalorder %v1140, 4
        %v1163 = vsel %vm1159, %v1143, %v1146
        %v1164 = vsel %vm1162, %v1152, 2102212464
        %v1165 = vsel %vm1161, %v1149, %v1164
        %v1166 = vsel %vm1160, %v1163, %v1165
        %v1167 = vsel %vm1159, %v1146, %v1149
        %v1168 = vsel %vm1162, %v1155, 920167782
        %v1169 = vsel %vm1161, %v1152, %v1168
        %v1170 = vsel %vm1160, %v1167, %v1169
        %v1171 = vsel %vm1159, %v1149, %v1152
        %v1172 = vsel %vm1162, %v1158, 1326507024
        %v1173 = vsel %vm1161, %v1155, %v1172
        %v1174 = vsel %vm1160, %v1171, %v1173
        %v1175 = vshll.u32 %v1135, 8
        %v1176 = vmul.u32.u64.compose %v1175, %v1174
        %v1177 = vextract.low.u32 %v1176
        %v1178 = vextract.high.u32 %v1176
        %v1179 = vmul.u32.u64.compose %v1175, %v1170
        %v1180 = vextract.low.u32 %v1179
        %v1181 = vextract.high.u32 %v1179
        %v1182 = vmul.u32 %v1175, %v1166
        %v1183 = vadd.s32 %v1178, %v1180
        %vm1184 = vc.u32 %v1178, %v1180
        %v1185 = vadd.s32 %v1181, 1
        %v1186 = vsel %vm1184, %v1185, %v1181
        %v1187 = vadd.s32 %v1182, %v1186
        %v1188 = vadd.s32 %v1187, 536870912
        %v1189 = vshrl.u32 %v1188, 30
        %v1190 = vshll.u32 %v1189, 30
        %v1191 = vsub.s32 %v1187, %v1190
        %vm1192 = vcmp.lt.s32.totalorder %v1191, 0
        %v1193 = vsub.s32 0, %v1191
        %v1194 = vsel %vm1192, %v1193, %v1191
        %v1195 = vclz %v1194
        %v1196 = vsub.s32 %v1195, 2
        %vm1197 = vcmp.gt.s32.totalorder 0, %v1196
        %v1198 = vsel %vm1197, 0, %v1196
        %v1199 = vsub.s32 32, %v1198
        %v1200 = vshll.u32 %v1191, %v1198
        %v1201 = vshrl.u32 %v1183, %v1199
        %v1202 = vor.u32 %v1200, %v1201
        %v1203 = vsub.s32 4294967266, %v1198
        %v1204 = vadd.s32 %v1203, 127
        %v1205 = vshll.u32 %v1204, 23
        %v1206 = vor.u32 4788187, %v1205
        %v1207 = vand.u32 2147483647, %v1206
        %v1209 = vcvt.s32.f32 %v1202
        %v1210 = vmul.f32 %v1209, %v1207
        %v1211 = vxor.u32 %v1210, 2147483648
        %v1212 = vsel %vm1129, %v1211, %v1210
        %v1213 = vsub.s32 4, %v1189
        %v1214 = vsel %vm1129, %v1213, %v1189
        %v1215 = vsel %vm1128, %v265, %v1212
        %v1216 = vsel %vm1128, 0, %v1214
        %v1217 = vcosq.f32.pop %v1215
        %v1218 = vsinq.f32.pop %v1215
        %vm1219 = vweird.f32 %v265
        %v1220 = vand.u32 %v1216, 3
        %vm1221 = vcmp.lt.s32.totalorder %v1220, 2
        %vm1222 = vcmp.eq.s32.totalorder %v1220, 0
        %v1223 = vxor.u32 %v1218, 2147483648
        %v1224 = vsel %vm1222, %v1217, %v1223
        %vm1225 = vcmp.eq.s32.totalorder %v1220, 2
        %v1226 = vxor.u32 %v1217, 2147483648
        %v1227 = vsel %vm1225, %v1226, %v1218
        %v1228 = vsel %vm1221, %v1224, %v1227
        %v1229 = vsel %vm1219, nan, %v1228
        %v1230 = vand.u32 2147483647, %v267
        %vm1231 = vcmp.le.f32.partialorder %v1230, 0.7853982
        %vm1232 = vcmp.lt.s32.totalorder %v267, 0
        %v1233 = vand.u32 %v267, 2139095040
        %v1234 = vshrl.u32 %v1233, 23
        %v1235 = vsub.s32 %v1234, 127
        %v1236 = vand.u32 2147483647, %v267
        %v1237 = vand.u32 %v1236, 8388607
        %v1238 = vor.u32 %v1237, 8388608
        %v1239 = vsub.s32 0, %v1238
        %v1240 = vadd.s32 %v1235, 1
        %vm1241 = vcmp.gt.s32.totalorder %v1240, 0
        %v1242 = vsel %vm1241, %v1240, 0
        %v1243 = vshrl.u32 %v1242, 5
        %v1244 = vand.u32 %v1242, 31
        %v1245 = vsub.s32 32, %v1244
        %v1246 = vshrl.u32 683565275, %v1245
        %v1247 = vshll.u32 683565275, %v1244
        %v1248 = vshrl.u32 2475754826, %v1245
        %v1249 = vor.u32 %v1247, %v1248
        %v1250 = vshll.u32 2475754826, %v1244
        %v1251 = vshrl.u32 2131351028, %v1245
        %v1252 = vor.u32 %v1250, %v1251
        %v1253 = vshll.u32 2131351028, %v1244
        %v1254 = vshrl.u32 2102212464, %v1245
        %v1255 = vor.u32 %v1253, %v1254
        %v1256 = vshll.u32 2102212464, %v1244
        %v1257 = vshrl.u32 920167782, %v1245
        %v1258 = vor.u32 %v1256, %v1257
        %v1259 = vshll.u32 920167782, %v1244
        %v1260 = vshrl.u32 1326507024, %v1245
        %v1261 = vor.u32 %v1259, %v1260
        %vm1262 = vcmp.lt.s32.totalorder %v1243, 1
        %vm1263 = vcmp.lt.s32.totalorder %v1243, 2
        %vm1264 = vcmp.lt.s32.totalorder %v1243, 3
        %vm1265 = vcmp.lt.s32.totalorder %v1243, 4
        %v1266 = vsel %vm1262, %v1246, %v1249
        %v1267 = vsel %vm1265, %v1255, 2102212464
        %v1268 = vsel %vm1264, %v1252, %v1267
        %v1269 = vsel %vm1263, %v1266, %v1268
        %v1270 = vsel %vm1262, %v1249, %v1252
        %v1271 = vsel %vm1265, %v1258, 920167782
        %v1272 = vsel %vm1264, %v1255, %v1271
        %v1273 = vsel %vm1263, %v1270, %v1272
        %v1274 = vsel %vm1262, %v1252, %v1255
        %v1275 = vsel %vm1265, %v1261, 1326507024
        %v1276 = vsel %vm1264, %v1258, %v1275
        %v1277 = vsel %vm1263, %v1274, %v1276
        %v1278 = vshll.u32 %v1238, 8
        %v1279 = vmul.u32.u64.compose %v1278, %v1277
        %v1280 = vextract.low.u32 %v1279
        %v1281 = vextract.high.u32 %v1279
        %v1282 = vmul.u32.u64.compose %v1278, %v1273
        %v1283 = vextract.low.u32 %v1282
        %v1284 = vextract.high.u32 %v1282
        %v1285 = vmul.u32 %v1278, %v1269
        %v1286 = vadd.s32 %v1281, %v1283
        %vm1287 = vc.u32 %v1281, %v1283
        %v1288 = vadd.s32 %v1284, 1
        %v1289 = vsel %vm1287, %v1288, %v1284
        %v1290 = vadd.s32 %v1285, %v1289
        %v1291 = vadd.s32 %v1290, 536870912
        %v1292 = vshrl.u32 %v1291, 30
        %v1293 = vshll.u32 %v1292, 30
        %v1294 = vsub.s32 %v1290, %v1293
        %vm1295 = vcmp.lt.s32.totalorder %v1294, 0
        %v1296 = vsub.s32 0, %v1294
        %v1297 = vsel %vm1295, %v1296, %v1294
        %v1298 = vclz %v1297
        %v1299 = vsub.s32 %v1298, 2
        %vm1300 = vcmp.gt.s32.totalorder 0, %v1299
        %v1301 = vsel %vm1300, 0, %v1299
        %v1302 = vsub.s32 32, %v1301
        %v1303 = vshll.u32 %v1294, %v1301
        %v1304 = vshrl.u32 %v1286, %v1302
        %v1305 = vor.u32 %v1303, %v1304
        %v1306 = vsub.s32 4294967266, %v1301
        %v1307 = vadd.s32 %v1306, 127
        %v1308 = vshll.u32 %v1307, 23
        %v1309 = vor.u32 4788187, %v1308
        %v1310 = vand.u32 2147483647, %v1309
        %v1312 = vcvt.s32.f32 %v1305
        %v1313 = vmul.f32 %v1312, %v1310
        %v1314 = vxor.u32 %v1313, 2147483648
        %v1315 = vsel %vm1232, %v1314, %v1313
        %v1316 = vsub.s32 4, %v1292
        %v1317 = vsel %vm1232, %v1316, %v1292
        %v1318 = vsel %vm1231, %v267, %v1315
        %v1319 = vsel %vm1231, 0, %v1317
        %v1320 = vcosq.f32.pop %v1318
        %v1321 = vsinq.f32.pop %v1318
        %vm1322 = vweird.f32 %v267
        %v1323 = vand.u32 %v1319, 3
        %vm1324 = vcmp.lt.s32.totalorder %v1323, 2
        %vm1325 = vcmp.eq.s32.totalorder %v1323, 0
        %v1326 = vxor.u32 %v1321, 2147483648
        %v1327 = vsel %vm1325, %v1320, %v1326
        %vm1328 = vcmp.eq.s32.totalorder %v1323, 2
        %v1329 = vxor.u32 %v1320, 2147483648
        %v1330 = vsel %vm1328, %v1329, %v1321
        %v1331 = vsel %vm1324, %v1327, %v1330
        %v1332 = vsel %vm1322, nan, %v1331
        %v1333 = vand.u32 2147483647, %v271
        %vm1334 = vcmp.le.f32.partialorder %v1333, 0.7853982
        %vm1335 = vcmp.lt.s32.totalorder %v271, 0
        %v1336 = vand.u32 %v271, 2139095040
        %v1337 = vshrl.u32 %v1336, 23
        %v1338 = vsub.s32 %v1337, 127
        %v1339 = vand.u32 2147483647, %v271
        %v1340 = vand.u32 %v1339, 8388607
        %v1341 = vor.u32 %v1340, 8388608
        %v1342 = vsub.s32 0, %v1341
        %v1343 = vadd.s32 %v1338, 1
        %vm1344 = vcmp.gt.s32.totalorder %v1343, 0
        %v1345 = vsel %vm1344, %v1343, 0
        %v1346 = vshrl.u32 %v1345, 5
        %v1347 = vand.u32 %v1345, 31
        %v1348 = vsub.s32 32, %v1347
        %v1349 = vshrl.u32 683565275, %v1348
        %v1350 = vshll.u32 683565275, %v1347
        %v1351 = vshrl.u32 2475754826, %v1348
        %v1352 = vor.u32 %v1350, %v1351
        %v1353 = vshll.u32 2475754826, %v1347
        %v1354 = vshrl.u32 2131351028, %v1348
        %v1355 = vor.u32 %v1353, %v1354
        %v1356 = vshll.u32 2131351028, %v1347
        %v1357 = vshrl.u32 2102212464, %v1348
        %v1358 = vor.u32 %v1356, %v1357
        %v1359 = vshll.u32 2102212464, %v1347
        %v1360 = vshrl.u32 920167782, %v1348
        %v1361 = vor.u32 %v1359, %v1360
        %v1362 = vshll.u32 920167782, %v1347
        %v1363 = vshrl.u32 1326507024, %v1348
        %v1364 = vor.u32 %v1362, %v1363
        %vm1365 = vcmp.lt.s32.totalorder %v1346, 1
        %vm1366 = vcmp.lt.s32.totalorder %v1346, 2
        %vm1367 = vcmp.lt.s32.totalorder %v1346, 3
        %vm1368 = vcmp.lt.s32.totalorder %v1346, 4
        %v1369 = vsel %vm1365, %v1349, %v1352
        %v1370 = vsel %vm1368, %v1358, 2102212464
        %v1371 = vsel %vm1367, %v1355, %v1370
        %v1372 = vsel %vm1366, %v1369, %v1371
        %v1373 = vsel %vm1365, %v1352, %v1355
        %v1374 = vsel %vm1368, %v1361, 920167782
        %v1375 = vsel %vm1367, %v1358, %v1374
        %v1376 = vsel %vm1366, %v1373, %v1375
        %v1377 = vsel %vm1365, %v1355, %v1358
        %v1378 = vsel %vm1368, %v1364, 1326507024
        %v1379 = vsel %vm1367, %v1361, %v1378
        %v1380 = vsel %vm1366, %v1377, %v1379
        %v1381 = vshll.u32 %v1341, 8
        %v1382 = vmul.u32.u64.compose %v1381, %v1380
        %v1383 = vextract.low.u32 %v1382
        %v1384 = vextract.high.u32 %v1382
        %v1385 = vmul.u32.u64.compose %v1381, %v1376
        %v1386 = vextract.low.u32 %v1385
        %v1387 = vextract.high.u32 %v1385
        %v1388 = vmul.u32 %v1381, %v1372
        %v1389 = vadd.s32 %v1384, %v1386
        %vm1390 = vc.u32 %v1384, %v1386
        %v1391 = vadd.s32 %v1387, 1
        %v1392 = vsel %vm1390, %v1391, %v1387
        %v1393 = vadd.s32 %v1388, %v1392
        %v1394 = vadd.s32 %v1393, 536870912
        %v1395 = vshrl.u32 %v1394, 30
        %v1396 = vshll.u32 %v1395, 30
        %v1397 = vsub.s32 %v1393, %v1396
        %vm1398 = vcmp.lt.s32.totalorder %v1397, 0
        %v1399 = vsub.s32 0, %v1397
        %v1400 = vsel %vm1398, %v1399, %v1397
        %v1401 = vclz %v1400
        %v1402 = vsub.s32 %v1401, 2
        %vm1403 = vcmp.gt.s32.totalorder 0, %v1402
        %v1404 = vsel %vm1403, 0, %v1402
        %v1405 = vsub.s32 32, %v1404
        %v1406 = vshll.u32 %v1397, %v1404
        %v1407 = vshrl.u32 %v1389, %v1405
        %v1408 = vor.u32 %v1406, %v1407
        %v1409 = vsub.s32 4294967266, %v1404
        %v1410 = vadd.s32 %v1409, 127
        %v1411 = vshll.u32 %v1410, 23
        %v1412 = vor.u32 4788187, %v1411
        %v1413 = vand.u32 2147483647, %v1412
        %v1415 = vcvt.s32.f32 %v1408
        %v1416 = vmul.f32 %v1415, %v1413
        %v1417 = vxor.u32 %v1416, 2147483648
        %v1418 = vsel %vm1335, %v1417, %v1416
        %v1419 = vsub.s32 4, %v1395
        %v1420 = vsel %vm1335, %v1419, %v1395
        %v1421 = vsel %vm1334, %v271, %v1418
        %v1422 = vsel %vm1334, 0, %v1420
        %v1423 = vcosq.f32.pop %v1421
        %v1424 = vsinq.f32.pop %v1421
        %vm1425 = vweird.f32 %v271
        %v1426 = vand.u32 %v1422, 3
        %vm1427 = vcmp.lt.s32.totalorder %v1426, 2
        %vm1428 = vcmp.eq.s32.totalorder %v1426, 0
        %v1429 = vxor.u32 %v1424, 2147483648
        %v1430 = vsel %vm1428, %v1423, %v1429
        %vm1431 = vcmp.eq.s32.totalorder %v1426, 2
        %v1432 = vxor.u32 %v1423, 2147483648
        %v1433 = vsel %vm1431, %v1432, %v1424
        %v1434 = vsel %vm1427, %v1430, %v1433
        %v1435 = vsel %vm1425, nan, %v1434
        %v1436 = vand.u32 2147483647, %v273
        %vm1437 = vcmp.le.f32.partialorder %v1436, 0.7853982
        %vm1438 = vcmp.lt.s32.totalorder %v273, 0
        %v1439 = vand.u32 %v273, 2139095040
        %v1440 = vshrl.u32 %v1439, 23
        %v1441 = vsub.s32 %v1440, 127
        %v1442 = vand.u32 2147483647, %v273
        %v1443 = vand.u32 %v1442, 8388607
        %v1444 = vor.u32 %v1443, 8388608
        %v1445 = vsub.s32 0, %v1444
        %v1446 = vadd.s32 %v1441, 1
        %vm1447 = vcmp.gt.s32.totalorder %v1446, 0
        %v1448 = vsel %vm1447, %v1446, 0
        %v1449 = vshrl.u32 %v1448, 5
        %v1450 = vand.u32 %v1448, 31
        %v1451 = vsub.s32 32, %v1450
        %v1452 = vshrl.u32 683565275, %v1451
        %v1453 = vshll.u32 683565275, %v1450
        %v1454 = vshrl.u32 2475754826, %v1451
        %v1455 = vor.u32 %v1453, %v1454
        %v1456 = vshll.u32 2475754826, %v1450
        %v1457 = vshrl.u32 2131351028, %v1451
        %v1458 = vor.u32 %v1456, %v1457
        %v1459 = vshll.u32 2131351028, %v1450
        %v1460 = vshrl.u32 2102212464, %v1451
        %v1461 = vor.u32 %v1459, %v1460
        %v1462 = vshll.u32 2102212464, %v1450
        %v1463 = vshrl.u32 920167782, %v1451
        %v1464 = vor.u32 %v1462, %v1463
        %v1465 = vshll.u32 920167782, %v1450
        %v1466 = vshrl.u32 1326507024, %v1451
        %v1467 = vor.u32 %v1465, %v1466
        %vm1468 = vcmp.lt.s32.totalorder %v1449, 1
        %vm1469 = vcmp.lt.s32.totalorder %v1449, 2
        %vm1470 = vcmp.lt.s32.totalorder %v1449, 3
        %vm1471 = vcmp.lt.s32.totalorder %v1449, 4
        %v1472 = vsel %vm1468, %v1452, %v1455
        %v1473 = vsel %vm1471, %v1461, 2102212464
        %v1474 = vsel %vm1470, %v1458, %v1473
        %v1475 = vsel %vm1469, %v1472, %v1474
        %v1476 = vsel %vm1468, %v1455, %v1458
        %v1477 = vsel %vm1471, %v1464, 920167782
        %v1478 = vsel %vm1470, %v1461, %v1477
        %v1479 = vsel %vm1469, %v1476, %v1478
        %v1480 = vsel %vm1468, %v1458, %v1461
        %v1481 = vsel %vm1471, %v1467, 1326507024
        %v1482 = vsel %vm1470, %v1464, %v1481
        %v1483 = vsel %vm1469, %v1480, %v1482
        %v1484 = vshll.u32 %v1444, 8
        %v1485 = vmul.u32.u64.compose %v1484, %v1483
        %v1486 = vextract.low.u32 %v1485
        %v1487 = vextract.high.u32 %v1485
        %v1488 = vmul.u32.u64.compose %v1484, %v1479
        %v1489 = vextract.low.u32 %v1488
        %v1490 = vextract.high.u32 %v1488
        %v1491 = vmul.u32 %v1484, %v1475
        %v1492 = vadd.s32 %v1487, %v1489
        %vm1493 = vc.u32 %v1487, %v1489
        %v1494 = vadd.s32 %v1490, 1
        %v1495 = vsel %vm1493, %v1494, %v1490
        %v1496 = vadd.s32 %v1491, %v1495
        %v1497 = vadd.s32 %v1496, 536870912
        %v1498 = vshrl.u32 %v1497, 30
        %v1499 = vshll.u32 %v1498, 30
        %v1500 = vsub.s32 %v1496, %v1499
        %vm1501 = vcmp.lt.s32.totalorder %v1500, 0
        %v1502 = vsub.s32 0, %v1500
        %v1503 = vsel %vm1501, %v1502, %v1500
        %v1504 = vclz %v1503
        %v1505 = vsub.s32 %v1504, 2
        %vm1506 = vcmp.gt.s32.totalorder 0, %v1505
        %v1507 = vsel %vm1506, 0, %v1505
        %v1508 = vsub.s32 32, %v1507
        %v1509 = vshll.u32 %v1500, %v1507
        %v1510 = vshrl.u32 %v1492, %v1508
        %v1511 = vor.u32 %v1509, %v1510
        %v1512 = vsub.s32 4294967266, %v1507
        %v1513 = vadd.s32 %v1512, 127
        %v1514 = vshll.u32 %v1513, 23
        %v1515 = vor.u32 4788187, %v1514
        %v1516 = vand.u32 2147483647, %v1515
        %v1518 = vcvt.s32.f32 %v1511
        %v1519 = vmul.f32 %v1518, %v1516
        %v1520 = vxor.u32 %v1519, 2147483648
        %v1521 = vsel %vm1438, %v1520, %v1519
        %v1522 = vsub.s32 4, %v1498
        %v1523 = vsel %vm1438, %v1522, %v1498
        %v1524 = vsel %vm1437, %v273, %v1521
        %v1525 = vsel %vm1437, 0, %v1523
        %v1526 = vcosq.f32.pop %v1524
        %v1527 = vsinq.f32.pop %v1524
        %vm1528 = vweird.f32 %v273
        %v1529 = vand.u32 %v1525, 3
        %vm1530 = vcmp.lt.s32.totalorder %v1529, 2
        %vm1531 = vcmp.eq.s32.totalorder %v1529, 0
        %v1532 = vxor.u32 %v1527, 2147483648
        %v1533 = vsel %vm1531, %v1526, %v1532
        %vm1534 = vcmp.eq.s32.totalorder %v1529, 2
        %v1535 = vxor.u32 %v1526, 2147483648
        %v1536 = vsel %vm1534, %v1535, %v1527
        %v1537 = vsel %vm1530, %v1533, %v1536
        %v1538 = vsel %vm1528, nan, %v1537
        %v1539 = vand.u32 2147483647, %v277
        %vm1540 = vcmp.le.f32.partialorder %v1539, 0.7853982
        %vm1541 = vcmp.lt.s32.totalorder %v277, 0
        %v1542 = vand.u32 %v277, 2139095040
        %v1543 = vshrl.u32 %v1542, 23
        %v1544 = vsub.s32 %v1543, 127
        %v1545 = vand.u32 2147483647, %v277
        %v1546 = vand.u32 %v1545, 8388607
        %v1547 = vor.u32 %v1546, 8388608
        %v1548 = vsub.s32 0, %v1547
        %v1549 = vadd.s32 %v1544, 1
        %vm1550 = vcmp.gt.s32.totalorder %v1549, 0
        %v1551 = vsel %vm1550, %v1549, 0
        %v1552 = vshrl.u32 %v1551, 5
        %v1553 = vand.u32 %v1551, 31
        %v1554 = vsub.s32 32, %v1553
        %v1555 = vshrl.u32 683565275, %v1554
        %v1556 = vshll.u32 683565275, %v1553
        %v1557 = vshrl.u32 2475754826, %v1554
        %v1558 = vor.u32 %v1556, %v1557
        %v1559 = vshll.u32 2475754826, %v1553
        %v1560 = vshrl.u32 2131351028, %v1554
        %v1561 = vor.u32 %v1559, %v1560
        %v1562 = vshll.u32 2131351028, %v1553
        %v1563 = vshrl.u32 2102212464, %v1554
        %v1564 = vor.u32 %v1562, %v1563
        %v1565 = vshll.u32 2102212464, %v1553
        %v1566 = vshrl.u32 920167782, %v1554
        %v1567 = vor.u32 %v1565, %v1566
        %v1568 = vshll.u32 920167782, %v1553
        %v1569 = vshrl.u32 1326507024, %v1554
        %v1570 = vor.u32 %v1568, %v1569
        %vm1571 = vcmp.lt.s32.totalorder %v1552, 1
        %vm1572 = vcmp.lt.s32.totalorder %v1552, 2
        %vm1573 = vcmp.lt.s32.totalorder %v1552, 3
        %vm1574 = vcmp.lt.s32.totalorder %v1552, 4
        %v1575 = vsel %vm1571, %v1555, %v1558
        %v1576 = vsel %vm1574, %v1564, 2102212464
        %v1577 = vsel %vm1573, %v1561, %v1576
        %v1578 = vsel %vm1572, %v1575, %v1577
        %v1579 = vsel %vm1571, %v1558, %v1561
        %v1580 = vsel %vm1574, %v1567, 920167782
        %v1581 = vsel %vm1573, %v1564, %v1580
        %v1582 = vsel %vm1572, %v1579, %v1581
        %v1583 = vsel %vm1571, %v1561, %v1564
        %v1584 = vsel %vm1574, %v1570, 1326507024
        %v1585 = vsel %vm1573, %v1567, %v1584
        %v1586 = vsel %vm1572, %v1583, %v1585
        %v1587 = vshll.u32 %v1547, 8
        %v1588 = vmul.u32.u64.compose %v1587, %v1586
        %v1589 = vextract.low.u32 %v1588
        %v1590 = vextract.high.u32 %v1588
        %v1591 = vmul.u32.u64.compose %v1587, %v1582
        %v1592 = vextract.low.u32 %v1591
        %v1593 = vextract.high.u32 %v1591
        %v1594 = vmul.u32 %v1587, %v1578
        %v1595 = vadd.s32 %v1590, %v1592
        %vm1596 = vc.u32 %v1590, %v1592
        %v1597 = vadd.s32 %v1593, 1
        %v1598 = vsel %vm1596, %v1597, %v1593
        %v1599 = vadd.s32 %v1594, %v1598
        %v1600 = vadd.s32 %v1599, 536870912
        %v1601 = vshrl.u32 %v1600, 30
        %v1602 = vshll.u32 %v1601, 30
        %v1603 = vsub.s32 %v1599, %v1602
        %vm1604 = vcmp.lt.s32.totalorder %v1603, 0
        %v1605 = vsub.s32 0, %v1603
        %v1606 = vsel %vm1604, %v1605, %v1603
        %v1607 = vclz %v1606
        %v1608 = vsub.s32 %v1607, 2
        %vm1609 = vcmp.gt.s32.totalorder 0, %v1608
        %v1610 = vsel %vm1609, 0, %v1608
        %v1611 = vsub.s32 32, %v1610
        %v1612 = vshll.u32 %v1603, %v1610
        %v1613 = vshrl.u32 %v1595, %v1611
        %v1614 = vor.u32 %v1612, %v1613
        %v1615 = vsub.s32 4294967266, %v1610
        %v1616 = vadd.s32 %v1615, 127
        %v1617 = vshll.u32 %v1616, 23
        %v1618 = vor.u32 4788187, %v1617
        %v1619 = vand.u32 2147483647, %v1618
        %v1621 = vcvt.s32.f32 %v1614
        %v1622 = vmul.f32 %v1621, %v1619
        %v1623 = vxor.u32 %v1622, 2147483648
        %v1624 = vsel %vm1541, %v1623, %v1622
        %v1625 = vsub.s32 4, %v1601
        %v1626 = vsel %vm1541, %v1625, %v1601
        %v1627 = vsel %vm1540, %v277, %v1624
        %v1628 = vsel %vm1540, 0, %v1626
        %v1629 = vcosq.f32.pop %v1627
        %v1630 = vsinq.f32.pop %v1627
        %vm1631 = vweird.f32 %v277
        %v1632 = vand.u32 %v1628, 3
        %vm1633 = vcmp.lt.s32.totalorder %v1632, 2
        %vm1634 = vcmp.eq.s32.totalorder %v1632, 0
        %v1635 = vxor.u32 %v1630, 2147483648
        %v1636 = vsel %vm1634, %v1629, %v1635
        %vm1637 = vcmp.eq.s32.totalorder %v1632, 2
        %v1638 = vxor.u32 %v1629, 2147483648
        %v1639 = vsel %vm1637, %v1638, %v1630
        %v1640 = vsel %vm1633, %v1636, %v1639
        %v1641 = vsel %vm1631, nan, %v1640
        %v1642 = vand.u32 2147483647, %v279
        %vm1643 = vcmp.le.f32.partialorder %v1642, 0.7853982
        %vm1644 = vcmp.lt.s32.totalorder %v279, 0
        %v1645 = vand.u32 %v279, 2139095040
        %v1646 = vshrl.u32 %v1645, 23
        %v1647 = vsub.s32 %v1646, 127
        %v1648 = vand.u32 2147483647, %v279
        %v1649 = vand.u32 %v1648, 8388607
        %v1650 = vor.u32 %v1649, 8388608
        %v1651 = vsub.s32 0, %v1650
        %v1652 = vadd.s32 %v1647, 1
        %vm1653 = vcmp.gt.s32.totalorder %v1652, 0
        %v1654 = vsel %vm1653, %v1652, 0
        %v1655 = vshrl.u32 %v1654, 5
        %v1656 = vand.u32 %v1654, 31
        %v1657 = vsub.s32 32, %v1656
        %v1658 = vshrl.u32 683565275, %v1657
        %v1659 = vshll.u32 683565275, %v1656
        %v1660 = vshrl.u32 2475754826, %v1657
        %v1661 = vor.u32 %v1659, %v1660
        %v1662 = vshll.u32 2475754826, %v1656
        %v1663 = vshrl.u32 2131351028, %v1657
        %v1664 = vor.u32 %v1662, %v1663
        %v1665 = vshll.u32 2131351028, %v1656
        %v1666 = vshrl.u32 2102212464, %v1657
        %v1667 = vor.u32 %v1665, %v1666
        %v1668 = vshll.u32 2102212464, %v1656
        %v1669 = vshrl.u32 920167782, %v1657
        %v1670 = vor.u32 %v1668, %v1669
        %v1671 = vshll.u32 920167782, %v1656
        %v1672 = vshrl.u32 1326507024, %v1657
        %v1673 = vor.u32 %v1671, %v1672
        %vm1674 = vcmp.lt.s32.totalorder %v1655, 1
        %vm1675 = vcmp.lt.s32.totalorder %v1655, 2
        %vm1676 = vcmp.lt.s32.totalorder %v1655, 3
        %vm1677 = vcmp.lt.s32.totalorder %v1655, 4
        %v1678 = vsel %vm1674, %v1658, %v1661
        %v1679 = vsel %vm1677, %v1667, 2102212464
        %v1680 = vsel %vm1676, %v1664, %v1679
        %v1681 = vsel %vm1675, %v1678, %v1680
        %v1682 = vsel %vm1674, %v1661, %v1664
        %v1683 = vsel %vm1677, %v1670, 920167782
        %v1684 = vsel %vm1676, %v1667, %v1683
        %v1685 = vsel %vm1675, %v1682, %v1684
        %v1686 = vsel %vm1674, %v1664, %v1667
        %v1687 = vsel %vm1677, %v1673, 1326507024
        %v1688 = vsel %vm1676, %v1670, %v1687
        %v1689 = vsel %vm1675, %v1686, %v1688
        %v1690 = vshll.u32 %v1650, 8
        %v1691 = vmul.u32.u64.compose %v1690, %v1689
        %v1692 = vextract.low.u32 %v1691
        %v1693 = vextract.high.u32 %v1691
        %v1694 = vmul.u32.u64.compose %v1690, %v1685
        %v1695 = vextract.low.u32 %v1694
        %v1696 = vextract.high.u32 %v1694
        %v1697 = vmul.u32 %v1690, %v1681
        %v1698 = vadd.s32 %v1693, %v1695
        %vm1699 = vc.u32 %v1693, %v1695
        %v1700 = vadd.s32 %v1696, 1
        %v1701 = vsel %vm1699, %v1700, %v1696
        %v1702 = vadd.s32 %v1697, %v1701
        %v1703 = vadd.s32 %v1702, 536870912
        %v1704 = vshrl.u32 %v1703, 30
        %v1705 = vshll.u32 %v1704, 30
        %v1706 = vsub.s32 %v1702, %v1705
        %vm1707 = vcmp.lt.s32.totalorder %v1706, 0
        %v1708 = vsub.s32 0, %v1706
        %v1709 = vsel %vm1707, %v1708, %v1706
        %v1710 = vclz %v1709
        %v1711 = vsub.s32 %v1710, 2
        %vm1712 = vcmp.gt.s32.totalorder 0, %v1711
        %v1713 = vsel %vm1712, 0, %v1711
        %v1714 = vsub.s32 32, %v1713
        %v1715 = vshll.u32 %v1706, %v1713
        %v1716 = vshrl.u32 %v1698, %v1714
        %v1717 = vor.u32 %v1715, %v1716
        %v1718 = vsub.s32 4294967266, %v1713
        %v1719 = vadd.s32 %v1718, 127
        %v1720 = vshll.u32 %v1719, 23
        %v1721 = vor.u32 4788187, %v1720
        %v1722 = vand.u32 2147483647, %v1721
        %v1724 = vcvt.s32.f32 %v1717
        %v1725 = vmul.f32 %v1724, %v1722
        %v1726 = vxor.u32 %v1725, 2147483648
        %v1727 = vsel %vm1644, %v1726, %v1725
        %v1728 = vsub.s32 4, %v1704
        %v1729 = vsel %vm1644, %v1728, %v1704
        %v1730 = vsel %vm1643, %v279, %v1727
        %v1731 = vsel %vm1643, 0, %v1729
        %v1732 = vcosq.f32.pop %v1730
        %v1733 = vsinq.f32.pop %v1730
        %vm1734 = vweird.f32 %v279
        %v1735 = vand.u32 %v1731, 3
        %vm1736 = vcmp.lt.s32.totalorder %v1735, 2
        %vm1737 = vcmp.eq.s32.totalorder %v1735, 0
        %v1738 = vxor.u32 %v1733, 2147483648
        %v1739 = vsel %vm1737, %v1732, %v1738
        %vm1740 = vcmp.eq.s32.totalorder %v1735, 2
        %v1741 = vxor.u32 %v1732, 2147483648
        %v1742 = vsel %vm1740, %v1741, %v1733
        %v1743 = vsel %vm1736, %v1739, %v1742
        %v1744 = vsel %vm1734, nan, %v1743
        %v1745 = vand.u32 2147483647, %v283
        %vm1746 = vcmp.le.f32.partialorder %v1745, 0.7853982
        %vm1747 = vcmp.lt.s32.totalorder %v283, 0
        %v1748 = vand.u32 %v283, 2139095040
        %v1749 = vshrl.u32 %v1748, 23
        %v1750 = vsub.s32 %v1749, 127
        %v1751 = vand.u32 2147483647, %v283
        %v1752 = vand.u32 %v1751, 8388607
        %v1753 = vor.u32 %v1752, 8388608
        %v1754 = vsub.s32 0, %v1753
        %v1755 = vadd.s32 %v1750, 1
        %vm1756 = vcmp.gt.s32.totalorder %v1755, 0
        %v1757 = vsel %vm1756, %v1755, 0
        %v1758 = vshrl.u32 %v1757, 5
        %v1759 = vand.u32 %v1757, 31
        %v1760 = vsub.s32 32, %v1759
        %v1761 = vshrl.u32 683565275, %v1760
        %v1762 = vshll.u32 683565275, %v1759
        %v1763 = vshrl.u32 2475754826, %v1760
        %v1764 = vor.u32 %v1762, %v1763
        %v1765 = vshll.u32 2475754826, %v1759
        %v1766 = vshrl.u32 2131351028, %v1760
        %v1767 = vor.u32 %v1765, %v1766
        %v1768 = vshll.u32 2131351028, %v1759
        %v1769 = vshrl.u32 2102212464, %v1760
        %v1770 = vor.u32 %v1768, %v1769
        %v1771 = vshll.u32 2102212464, %v1759
        %v1772 = vshrl.u32 920167782, %v1760
        %v1773 = vor.u32 %v1771, %v1772
        %v1774 = vshll.u32 920167782, %v1759
        %v1775 = vshrl.u32 1326507024, %v1760
        %v1776 = vor.u32 %v1774, %v1775
        %vm1777 = vcmp.lt.s32.totalorder %v1758, 1
        %vm1778 = vcmp.lt.s32.totalorder %v1758, 2
        %vm1779 = vcmp.lt.s32.totalorder %v1758, 3
        %vm1780 = vcmp.lt.s32.totalorder %v1758, 4
        %v1781 = vsel %vm1777, %v1761, %v1764
        %v1782 = vsel %vm1780, %v1770, 2102212464
        %v1783 = vsel %vm1779, %v1767, %v1782
        %v1784 = vsel %vm1778, %v1781, %v1783
        %v1785 = vsel %vm1777, %v1764, %v1767
        %v1786 = vsel %vm1780, %v1773, 920167782
        %v1787 = vsel %vm1779, %v1770, %v1786
        %v1788 = vsel %vm1778, %v1785, %v1787
        %v1789 = vsel %vm1777, %v1767, %v1770
        %v1790 = vsel %vm1780, %v1776, 1326507024
        %v1791 = vsel %vm1779, %v1773, %v1790
        %v1792 = vsel %vm1778, %v1789, %v1791
        %v1793 = vshll.u32 %v1753, 8
        %v1794 = vmul.u32.u64.compose %v1793, %v1792
        %v1795 = vextract.low.u32 %v1794
        %v1796 = vextract.high.u32 %v1794
        %v1797 = vmul.u32.u64.compose %v1793, %v1788
        %v1798 = vextract.low.u32 %v1797
        %v1799 = vextract.high.u32 %v1797
        %v1800 = vmul.u32 %v1793, %v1784
        %v1801 = vadd.s32 %v1796, %v1798
        %vm1802 = vc.u32 %v1796, %v1798
        %v1803 = vadd.s32 %v1799, 1
        %v1804 = vsel %vm1802, %v1803, %v1799
        %v1805 = vadd.s32 %v1800, %v1804
        %v1806 = vadd.s32 %v1805, 536870912
        %v1807 = vshrl.u32 %v1806, 30
        %v1808 = vshll.u32 %v1807, 30
        %v1809 = vsub.s32 %v1805, %v1808
        %vm1810 = vcmp.lt.s32.totalorder %v1809, 0
        %v1811 = vsub.s32 0, %v1809
        %v1812 = vsel %vm1810, %v1811, %v1809
        %v1813 = vclz %v1812
        %v1814 = vsub.s32 %v1813, 2
        %vm1815 = vcmp.gt.s32.totalorder 0, %v1814
        %v1816 = vsel %vm1815, 0, %v1814
        %v1817 = vsub.s32 32, %v1816
        %v1818 = vshll.u32 %v1809, %v1816
        %v1819 = vshrl.u32 %v1801, %v1817
        %v1820 = vor.u32 %v1818, %v1819
        %v1821 = vsub.s32 4294967266, %v1816
        %v1822 = vadd.s32 %v1821, 127
        %v1823 = vshll.u32 %v1822, 23
        %v1824 = vor.u32 4788187, %v1823
        %v1825 = vand.u32 2147483647, %v1824
        %v1827 = vcvt.s32.f32 %v1820
        %v1828 = vmul.f32 %v1827, %v1825
        %v1829 = vxor.u32 %v1828, 2147483648
        %v1830 = vsel %vm1747, %v1829, %v1828
        %v1831 = vsub.s32 4, %v1807
        %v1832 = vsel %vm1747, %v1831, %v1807
        %v1833 = vsel %vm1746, %v283, %v1830
        %v1834 = vsel %vm1746, 0, %v1832
        %v1835 = vcosq.f32.pop %v1833
        %v1836 = vsinq.f32.pop %v1833
        %vm1837 = vweird.f32 %v283
        %v1838 = vand.u32 %v1834, 3
        %vm1839 = vcmp.lt.s32.totalorder %v1838, 2
        %vm1840 = vcmp.eq.s32.totalorder %v1838, 0
        %v1841 = vxor.u32 %v1836, 2147483648
        %v1842 = vsel %vm1840, %v1835, %v1841
        %vm1843 = vcmp.eq.s32.totalorder %v1838, 2
        %v1844 = vxor.u32 %v1835, 2147483648
        %v1845 = vsel %vm1843, %v1844, %v1836
        %v1846 = vsel %vm1839, %v1842, %v1845
        %v1847 = vsel %vm1837, nan, %v1846
        %v1848 = vand.u32 2147483647, %v285
        %vm1849 = vcmp.le.f32.partialorder %v1848, 0.7853982
        %vm1850 = vcmp.lt.s32.totalorder %v285, 0
        %v1851 = vand.u32 %v285, 2139095040
        %v1852 = vshrl.u32 %v1851, 23
        %v1853 = vsub.s32 %v1852, 127
        %v1854 = vand.u32 2147483647, %v285
        %v1855 = vand.u32 %v1854, 8388607
        %v1856 = vor.u32 %v1855, 8388608
        %v1857 = vsub.s32 0, %v1856
        %v1858 = vadd.s32 %v1853, 1
        %vm1859 = vcmp.gt.s32.totalorder %v1858, 0
        %v1860 = vsel %vm1859, %v1858, 0
        %v1861 = vshrl.u32 %v1860, 5
        %v1862 = vand.u32 %v1860, 31
        %v1863 = vsub.s32 32, %v1862
        %v1864 = vshrl.u32 683565275, %v1863
        %v1865 = vshll.u32 683565275, %v1862
        %v1866 = vshrl.u32 2475754826, %v1863
        %v1867 = vor.u32 %v1865, %v1866
        %v1868 = vshll.u32 2475754826, %v1862
        %v1869 = vshrl.u32 2131351028, %v1863
        %v1870 = vor.u32 %v1868, %v1869
        %v1871 = vshll.u32 2131351028, %v1862
        %v1872 = vshrl.u32 2102212464, %v1863
        %v1873 = vor.u32 %v1871, %v1872
        %v1874 = vshll.u32 2102212464, %v1862
        %v1875 = vshrl.u32 920167782, %v1863
        %v1876 = vor.u32 %v1874, %v1875
        %v1877 = vshll.u32 920167782, %v1862
        %v1878 = vshrl.u32 1326507024, %v1863
        %v1879 = vor.u32 %v1877, %v1878
        %vm1880 = vcmp.lt.s32.totalorder %v1861, 1
        %vm1881 = vcmp.lt.s32.totalorder %v1861, 2
        %vm1882 = vcmp.lt.s32.totalorder %v1861, 3
        %vm1883 = vcmp.lt.s32.totalorder %v1861, 4
        %v1884 = vsel %vm1880, %v1864, %v1867
        %v1885 = vsel %vm1883, %v1873, 2102212464
        %v1886 = vsel %vm1882, %v1870, %v1885
        %v1887 = vsel %vm1881, %v1884, %v1886
        %v1888 = vsel %vm1880, %v1867, %v1870
        %v1889 = vsel %vm1883, %v1876, 920167782
        %v1890 = vsel %vm1882, %v1873, %v1889
        %v1891 = vsel %vm1881, %v1888, %v1890
        %v1892 = vsel %vm1880, %v1870, %v1873
        %v1893 = vsel %vm1883, %v1879, 1326507024
        %v1894 = vsel %vm1882, %v1876, %v1893
        %v1895 = vsel %vm1881, %v1892, %v1894
        %v1896 = vshll.u32 %v1856, 8
        %v1897 = vmul.u32.u64.compose %v1896, %v1895
        %v1898 = vextract.low.u32 %v1897
        %v1899 = vextract.high.u32 %v1897
        %v1900 = vmul.u32.u64.compose %v1896, %v1891
        %v1901 = vextract.low.u32 %v1900
        %v1902 = vextract.high.u32 %v1900
        %v1903 = vmul.u32 %v1896, %v1887
        %v1904 = vadd.s32 %v1899, %v1901
        %vm1905 = vc.u32 %v1899, %v1901
        %v1906 = vadd.s32 %v1902, 1
        %v1907 = vsel %vm1905, %v1906, %v1902
        %v1908 = vadd.s32 %v1903, %v1907
        %v1909 = vadd.s32 %v1908, 536870912
        %v1910 = vshrl.u32 %v1909, 30
        %v1911 = vshll.u32 %v1910, 30
        %v1912 = vsub.s32 %v1908, %v1911
        %vm1913 = vcmp.lt.s32.totalorder %v1912, 0
        %v1914 = vsub.s32 0, %v1912
        %v1915 = vsel %vm1913, %v1914, %v1912
        %v1916 = vclz %v1915
        %v1917 = vsub.s32 %v1916, 2
        %vm1918 = vcmp.gt.s32.totalorder 0, %v1917
        %v1919 = vsel %vm1918, 0, %v1917
        %v1920 = vsub.s32 32, %v1919
        %v1921 = vshll.u32 %v1912, %v1919
        %v1922 = vshrl.u32 %v1904, %v1920
        %v1923 = vor.u32 %v1921, %v1922
        %v1924 = vsub.s32 4294967266, %v1919
        %v1925 = vadd.s32 %v1924, 127
        %v1926 = vshll.u32 %v1925, 23
        %v1927 = vor.u32 4788187, %v1926
        %v1928 = vand.u32 2147483647, %v1927
        %v1930 = vcvt.s32.f32 %v1923
        %v1931 = vmul.f32 %v1930, %v1928
        %v1932 = vxor.u32 %v1931, 2147483648
        %v1933 = vsel %vm1850, %v1932, %v1931
        %v1934 = vsub.s32 4, %v1910
        %v1935 = vsel %vm1850, %v1934, %v1910
        %v1936 = vsel %vm1849, %v285, %v1933
        %v1937 = vsel %vm1849, 0, %v1935
        %v1938 = vcosq.f32.pop %v1936
        %v1939 = vsinq.f32.pop %v1936
        %vm1940 = vweird.f32 %v285
        %v1941 = vand.u32 %v1937, 3
        %vm1942 = vcmp.lt.s32.totalorder %v1941, 2
        %vm1943 = vcmp.eq.s32.totalorder %v1941, 0
        %v1944 = vxor.u32 %v1939, 2147483648
        %v1945 = vsel %vm1943, %v1938, %v1944
        %vm1946 = vcmp.eq.s32.totalorder %v1941, 2
        %v1947 = vxor.u32 %v1938, 2147483648
        %v1948 = vsel %vm1946, %v1947, %v1939
        %v1949 = vsel %vm1942, %v1945, %v1948
        %v1950 = vsel %vm1940, nan, %v1949
        %1951 = vst [vmem:[%s161 + $0x40] sm:$0xff] %v1229
        %1952 = vst [vmem:[%s161 + $0x48] sm:$0xff] %v1332
        %1953 = vst [vmem:[%s161 + $0x50] sm:$0xff] %v1435
        %1954 = vst [vmem:[%s161 + $0x58] sm:$0xff] %v1538
        %1955 = vst [vmem:[%s161 + $0x60] sm:$0xff] %v1641
        %1956 = vst [vmem:[%s161 + $0x68] sm:$0xff] %v1744
        %1957 = vst [vmem:[%s161 + $0x70] sm:$0xff] %v1847
        %1958 = vst [vmem:[%s161 + $0x78] sm:$0xff] %v1950
        %s1959 = sand.u32 %s87, 1
        %s1960 = scalar_lea.sflag [#allocation3], %s1959
        %s1961 = sand.u32 %s87, 1
        %s1962 = smul.addr %s1961, 128
        %s1963 = scalar_lea.vmem [#allocation2], %s1962
        // Predicated region
        $region29: #{tpu_custom_call.1} parent=27 // pred_check
          %p1964 = pneg %p97
        $region30: #{tpu_custom_call.1} parent=27 // pred_check_branch
          %1966 = sbr.rel (%p1964) target = $region32
        $region31: #{tpu_custom_call.1} parent=27 // pred_region
          %s1967 = smul.u32 2, %s21
          %s1969 = ssub.s32 2048, 2048
          %1970 = vsyncadd %s1960, %s1969
          %s1971 = smul.addr %s20, 16
          %s1972 = sadd.s32 %s1967, %s1971
          %s1973 = smul.addr %s1972, 128
          %s1974 = scalar_lea.hbm %s2, %s1973
          %s1975 = sshll.u32 %s1963, 4
          %s1976 = int_to_ptr.vmem [resolvable:$true] %s1975
          %1981 = dma.vmem_to_hbm [thread:$0]  %s1976, 2048, %s1974, %s1960, 256, 256, 16
        $region32: #{tpu_custom_call.1} parent=27 // pred_fallthru
          _
      $region28: #{tpu_custom_call.1} parent=5 // pred_fallthru
        _
      %p1982 = scmp.le.s32.totalorder 2, %s11
      // Predicated region
      $region33: #{tpu_custom_call.1} parent=5 // pred_check
        %p1983 = pneg %p1982
      $region34: #{tpu_custom_call.1} parent=5 // pred_check_branch
        %1985 = sbr.rel (%p1983) target = $region36
      $region35: #{tpu_custom_call.1} parent=5 // pred_region
        %s1986 = ssub.s32 %s11, 2
        // Predicated region
        $region37: #{tpu_custom_call.1} parent=35 // pred_check
          %p1987 = pneg %p103
        $region38: #{tpu_custom_call.1} parent=35 // pred_check_branch
          %1989 = sbr.rel (%p1987) target = $region40
        $region39: #{tpu_custom_call.1} parent=35 // pred_region
          %s1990 = sand.u32 %s88, 1
          %s1991 = scalar_lea.sflag [#allocation3], %s1990
          %s1992 = sand.u32 %s88, 1
          %s1993 = smul.addr %s1992, 128
          %s1994 = scalar_lea.vmem [#allocation2], %s1993
          %1995 = dma.done %s1991, 2048
        $region40: #{tpu_custom_call.1} parent=35 // pred_fallthru
          _
      $region36: #{tpu_custom_call.1} parent=5 // pred_fallthru
        _
    $region6: #{tpu_custom_call.1} parent=1 // loop_footer
      %s15 = sadd.s32 1, %s11
    $region7: #{tpu_custom_call.1} parent=1 // loop_footer_branch
      %10 = sbr.rel target = $region3
    $region8: #{tpu_custom_call.1} parent=1 // loop_exit
      _
    %1996 = vsyncpa [#allocation3], 1
    %s1997 = scalar_lea.sflag [#allocation3], 1
    %1998 = vsyncpa %s1997, 1

</llo_original>
